<compile_context>
chip_gen: v7x
topology: tpu7x:2x2x1
jax: 0.10.0
libtpu: 0.0.40
codegen_flags: <defaults>
</compile_context>

<pallas_src>
import math
from functools import partial

import jax
import jax.numpy as jnp
import numpy as np
from jax import lax
from jax.experimental import pallas as pl
from jax.experimental.pallas import tpu as pltpu

NUM_GROUPS = 32
EPS = 1e-5  # nn.GroupNorm default eps


def _pick_tile(hw, cap):
    """Largest divisor of hw that is <= cap, preferring multiples of 8."""
    cap = min(cap, hw)
    fallback = None
    for d in range(cap, 0, -1):
        if hw % d == 0:
            if d % 8 == 0:
                return d
            if fallback is None:
                fallback = d
    return fallback if fallback is not None else hw


def vae_attention_kernel(x_ref, gamma_ref, beta_ref, memb_ref, membT_ref,
                         wqkv_ref, bqkv_ref, wo_ref, bo_ref, o_ref,
                         q_scr, k_scr, kT_scr, v_scr, *, tr, tq):
    # x_ref: (HW, C) block for one batch element (batch dim squeezed).
    hw, c = x_ref.shape
    cg = c // NUM_GROUPS
    n_rt = hw // tr
    n_qt = hw // tq

    memb = memb_ref[...]            # (C, G) f32 group one-hot
    membT = membT_ref[...]          # (G, C) f32
    inv_cnt = jnp.float32(1.0 / (hw * cg))

    # ---------------- GroupNorm(32, C): two-pass f32 stats, row-tiled -----
    def _sum_body(t, acc):
        off = pl.multiple_of(t * tr, tr)
        xt = x_ref[pl.ds(off, tr), :].astype(jnp.float32)
        return acc + jnp.sum(xt, axis=0, keepdims=True)

    ch_sum = lax.fori_loop(0, n_rt, _sum_body, jnp.zeros((1, c), jnp.float32))
    grp_mean = jnp.dot(ch_sum, memb, preferred_element_type=jnp.float32) * inv_cnt
    mean_c = jnp.dot(grp_mean, membT, preferred_element_type=jnp.float32)   # (1, C)

    def _sq_body(t, acc):
        off = pl.multiple_of(t * tr, tr)
        xc = x_ref[pl.ds(off, tr), :].astype(jnp.float32) - mean_c
        return acc + jnp.sum(xc * xc, axis=0, keepdims=True)

    ch_sq = lax.fori_loop(0, n_rt, _sq_body, jnp.zeros((1, c), jnp.float32))
    grp_var = jnp.dot(ch_sq, memb, preferred_element_type=jnp.float32) * inv_cnt
    inv_c = jnp.dot(lax.rsqrt(grp_var + EPS), membT,
                    preferred_element_type=jnp.float32)                     # (1, C)

    # Fold gamma/beta/mean into one affine: xn = x * scale_c + shift_c.
    scale_c = inv_c * gamma_ref[...]
    shift_c = beta_ref[...] - mean_c * scale_c

    # ---------------- fused QKV projection, row-tiled (bf16 MXU, f32 acc) --
    wqkv = wqkv_ref[...]            # (C, 3C) bf16, Q columns pre-scaled
    bqkv = bqkv_ref[...]            # (1, 3C) f32

    def _qkv_body(t, carry):
        off = pl.multiple_of(t * tr, tr)
        xt = x_ref[pl.ds(off, tr), :].astype(jnp.float32)
        xn_t = (xt * scale_c + shift_c).astype(jnp.bfloat16)                # (TR, C)
        qkv_t = jnp.dot(xn_t, wqkv, preferred_element_type=jnp.float32) + bqkv
        q_scr[pl.ds(off, tr), :] = qkv_t[:, :c].astype(jnp.bfloat16)
        k_scr[pl.ds(off, tr), :] = qkv_t[:, c:2 * c].astype(jnp.bfloat16)
        v_scr[pl.ds(off, tr), :] = qkv_t[:, 2 * c:].astype(jnp.bfloat16)
        return carry

    lax.fori_loop(0, n_rt, _qkv_body, 0)

    # One full K transpose per batch element -> clean (TQ,C)x(C,HW) MXU feed.
    kT_scr[...] = k_scr[...].T

    # ---------------- attention, Q-row-tiled, unroll=2 ---------------------
    wo = wo_ref[...]                # (C, C) bf16
    bo = bo_ref[...]                # (1, C) f32

    def _attn_body(t, carry):
        off = pl.multiple_of(t * tq, tq)
        q_t = q_scr[pl.ds(off, tq), :]                                      # (TQ, C) bf16
        s = jnp.dot(q_t, kT_scr[...], preferred_element_type=jnp.float32)   # (TQ, HW)
        m = jnp.max(s, axis=-1, keepdims=True)
        p = jnp.exp(s - m)
        denom = jnp.sum(p, axis=-1, keepdims=True)
        attn = jnp.dot(p.astype(jnp.bfloat16), v_scr[...],
                       preferred_element_type=jnp.float32)                  # (TQ, C)
        attn = attn * pl.reciprocal(denom, approx=False)    # normalize after PV
        out_t = jnp.dot(attn.astype(jnp.bfloat16), wo,
                        preferred_element_type=jnp.float32) + bo
        out_t = out_t + x_ref[pl.ds(off, tq), :].astype(jnp.float32)        # residual
        o_ref[pl.ds(off, tq), :] = out_t.astype(o_ref.dtype)
        return carry

    lax.fori_loop(0, n_qt, _attn_body, 0, unroll=2 if n_qt >= 2 else 1)


@jax.jit
def vae_attention_block(x_nchw, params):
    n, c, h, w = x_nchw.shape
    hw = h * w
    assert c % NUM_GROUPS == 0
    # NCHW -> (N, HW, C)  [view(n,c,h*w).transpose(-1,-2) in the PyTorch code]
    x_seq = jnp.transpose(x_nchw.reshape(n, c, hw), (0, 2, 1))

    # Fused QKV weight/bias; 1/sqrt(C) attention scale folded into Q columns.
    scale = 1.0 / math.sqrt(c)
    wqkv = jnp.concatenate([params["wq"] * scale, params["wk"], params["wv"]],
                           axis=1).astype(jnp.bfloat16)                     # (C, 3C)
    bqkv = jnp.concatenate([params["bq"] * scale, params["bk"], params["bv"]],
                           axis=1).astype(jnp.float32)                      # (1, 3C)
    wo_b = params["wo"].astype(jnp.bfloat16)                                # (C, C)

    # Group one-hots as tiny resident f32 inputs.
    g_idx = np.arange(c) // (c // NUM_GROUPS)
    memb = jnp.asarray(g_idx[:, None] == np.arange(NUM_GROUPS)[None, :],
                       dtype=jnp.float32)                                   # (C, G)
    membT = memb.T                                                          # (G, C)

    # Per-generation VMEM budget: ~75% of physical capacity.
    try:
        vmem_cap = int(pltpu.get_tpu_info().vmem_capacity_bytes)
    except Exception:
        vmem_cap = 64 * 1024 * 1024
    vmem_limit = min(int(vmem_cap * 0.75), 100 * 1024 * 1024)

    tr = _pick_tile(hw, 256)                                  # QKV / stats row tile
    tq = _pick_tile(hw, 512 if vmem_cap >= 96 * 1024 * 1024 else 256)  # Q tile

    kernel = partial(vae_attention_kernel, tr=tr, tq=tq)

    full2 = lambda b: (0, 0)
    out_seq = pl.pallas_call(
        kernel,
        out_shape=jax.ShapeDtypeStruct((n, hw, c), x_nchw.dtype),
        grid_spec=pltpu.PrefetchScalarGridSpec(
            num_scalar_prefetch=0,
            grid=(n,),
            in_specs=[
                pl.BlockSpec((None, hw, c), lambda b: (b, 0, 0)),   # x (batch squeezed)
                pl.BlockSpec((1, c), full2),                        # gamma
                pl.BlockSpec((1, c), full2),                        # beta
                pl.BlockSpec((c, NUM_GROUPS), full2),               # memb
                pl.BlockSpec((NUM_GROUPS, c), full2),               # membT
                pl.BlockSpec((c, 3 * c), full2),                    # wqkv (bf16)
                pl.BlockSpec((1, 3 * c), full2),                    # bqkv
                pl.BlockSpec((c, c), full2),                        # wo (bf16)
                pl.BlockSpec((1, c), full2),                        # bo
            ],
            out_specs=pl.BlockSpec((None, hw, c), lambda b: (b, 0, 0)),
            scratch_shapes=[
                pltpu.VMEM((hw, c), jnp.bfloat16),   # Q (pre-scaled via weight folding)
                pltpu.VMEM((hw, c), jnp.bfloat16),   # K
                pltpu.VMEM((c, hw), jnp.bfloat16),   # K^T
                pltpu.VMEM((hw, c), jnp.bfloat16),   # V
            ]),
        compiler_params=pltpu.CompilerParams(
            dimension_semantics=("parallel",),       # batch steps independent
            vmem_limit_bytes=vmem_limit),
    )(x_seq, params["gamma"], params["beta"], memb, membT,
      wqkv, bqkv, wo_b, params["bo"])

    # (N, HW, C) -> NCHW   (wrapper-side layout glue)
    return jnp.transpose(out_seq, (0, 2, 1)).reshape(n, c, h, w)


def reference(x, p):
    """Pure-JAX f32 reference matching the PyTorch forward."""
    n, c, h, w = x.shape
    hw = h * w
    xg = x.reshape(n, NUM_GROUPS, c // NUM_GROUPS, hw)
    mean = xg.mean(axis=(2, 3), keepdims=True)
    var = xg.var(axis=(2, 3), keepdims=True)
    xn = (xg - mean) / jnp.sqrt(var + EPS)
    xn = xn.reshape(n, c, hw) * p["gamma"].reshape(1, c, 1) + p["beta"].reshape(1, c, 1)
    seq = jnp.transpose(xn, (0, 2, 1))                        # (N, HW, C)
    q = seq @ p["wq"] + p["bq"]
    k = seq @ p["wk"] + p["bk"]
    v = seq @ p["wv"] + p["bv"]
    sc = jnp.einsum("bqc,bkc->bqk", q, k) / math.sqrt(c)
    a = jax.nn.softmax(sc, axis=-1)
    o = jnp.einsum("bqk,bkc->bqc", a, v) @ p["wo"] + p["bo"]
    o = jnp.transpose(o, (0, 2, 1)).reshape(n, c, h, w)
    return o + x


if __name__ == "__main__":
    # GroupNorm(32, channels) requires channels % 32 == 0; C=128 keeps the
    # output lane-dense (last dim a multiple of 128). Spatial 8x8 -> HW=64.
    N, C, H, W = 2, 128, 8, 8

    key = jax.random.PRNGKey(0)
    ks = jax.random.split(key, 12)
    x = jax.random.normal(ks[0], (N, C, H, W), jnp.float32)

    s = 1.0 / math.sqrt(C)
    params = {
        "gamma": 1.0 + 0.1 * jax.random.normal(ks[1], (1, C), jnp.float32),
        "beta": 0.1 * jax.random.normal(ks[2], (1, C), jnp.float32),
        "wq": s * jax.random.normal(ks[3], (C, C), jnp.float32),
        "bq": 0.05 * jax.random.normal(ks[4], (1, C), jnp.float32),
        "wk": s * jax.random.normal(ks[5], (C, C), jnp.float32),
        "bk": 0.05 * jax.random.normal(ks[6], (1, C), jnp.float32),
        "wv": s * jax.random.normal(ks[7], (C, C), jnp.float32),
        "bv": 0.05 * jax.random.normal(ks[8], (1, C), jnp.float32),
        "wo": s * jax.random.normal(ks[9], (C, C), jnp.float32),
        "bo": 0.05 * jax.random.normal(ks[10], (1, C), jnp.float32),
    }

    out = jax.block_until_ready(vae_attention_block(x, params))
    ref = jax.block_until_ready(reference(x, params))
    # Tolerance reflects bf16 MXU operands (f32 accumulation) in the kernel
    # vs. an all-f32 reference.
    np.testing.assert_allclose(np.asarray(out), np.asarray(ref),
                               rtol=5e-2, atol=5e-2)
    print("KERNEL_OK")
</pallas_src>

<mosaic_0001>
module attributes {stable_mosaic.version = 11 : i64} {
  func.func @vae_attention_kernel(%arg0: i32, %arg1: memref<1x64x128xf32, #tpu.memory_space<vmem>>, %arg2: memref<1x128xf32, #tpu.memory_space<vmem>>, %arg3: memref<1x128xf32, #tpu.memory_space<vmem>>, %arg4: memref<128x32xf32, #tpu.memory_space<vmem>>, %arg5: memref<32x128xf32, #tpu.memory_space<vmem>>, %arg6: memref<128x384xbf16, #tpu.memory_space<vmem>>, %arg7: memref<1x384xf32, #tpu.memory_space<vmem>>, %arg8: memref<128x128xbf16, #tpu.memory_space<vmem>>, %arg9: memref<1x128xf32, #tpu.memory_space<vmem>>, %arg10: memref<1x64x128xf32, #tpu.memory_space<vmem>>, %arg11: memref<64x128xbf16, #tpu.memory_space<vmem>>, %arg12: memref<64x128xbf16, #tpu.memory_space<vmem>>, %arg13: memref<128x64xbf16, #tpu.memory_space<vmem>>, %arg14: memref<64x128xbf16, #tpu.memory_space<vmem>>) attributes {dimension_semantics = [#tpu.dimension_semantics<parallel>], iteration_bounds = array<i64: 2>, scalar_prefetch = 0 : i64, scratch_operands = 4 : i64, tpu.core_type = #tpu.core_type<tc>, window_params = [{transform_indices = @transform_0, window_bounds = array<i64: 1, 64, 128>}, {pipeline_mode = #tpu.pipeline_mode<synchronous>, transform_indices = @transform_1, window_bounds = array<i64: 1, 128>}, {pipeline_mode = #tpu.pipeline_mode<synchronous>, transform_indices = @transform_2, window_bounds = array<i64: 1, 128>}, {pipeline_mode = #tpu.pipeline_mode<synchronous>, transform_indices = @transform_3, window_bounds = array<i64: 128, 32>}, {pipeline_mode = #tpu.pipeline_mode<synchronous>, transform_indices = @transform_4, window_bounds = array<i64: 32, 128>}, {pipeline_mode = #tpu.pipeline_mode<synchronous>, transform_indices = @transform_5, window_bounds = array<i64: 128, 384>}, {pipeline_mode = #tpu.pipeline_mode<synchronous>, transform_indices = @transform_6, window_bounds = array<i64: 1, 384>}, {pipeline_mode = #tpu.pipeline_mode<synchronous>, transform_indices = @transform_7, window_bounds = array<i64: 128, 128>}, {pipeline_mode = #tpu.pipeline_mode<synchronous>, transform_indices = @transform_8, window_bounds = array<i64: 1, 128>}, {transform_indices = @transform_9, window_bounds = array<i64: 1, 64, 128>}]} {
    %c0 = arith.constant 0 : index
    %c0_0 = arith.constant 0 : index
    %0 = vector.load %arg4[%c0, %c0_0] : memref<128x32xf32, #tpu.memory_space<vmem>>, vector<128x32xf32>
    %c0_1 = arith.constant 0 : index
    %c0_2 = arith.constant 0 : index
    %1 = vector.load %arg5[%c0_1, %c0_2] : memref<32x128xf32, #tpu.memory_space<vmem>>, vector<32x128xf32>
    %cst = arith.constant 0.000000e+00 : f32
    %2 = vector.broadcast %cst : f32 to vector<1x128xf32>
    %c0_i32 = arith.constant 0 : i32
    %c64_i32 = arith.constant 64 : i32
    %3 = arith.muli %c0_i32, %c64_i32 : i32
    %4 = tpu.assume_multiple %3, 64 : i32
    %c0_3 = arith.constant 0 : index
    %5 = arith.index_cast %4 : i32 to index
    %c0_4 = arith.constant 0 : index
    %6 = vector.load %arg1[%c0_3, %5, %c0_4] : memref<1x64x128xf32, #tpu.memory_space<vmem>>, vector<1x64x128xf32>
    %7 = vector.shape_cast %6 : vector<1x64x128xf32> to vector<64x128xf32>
    %cst_5 = arith.constant dense<0.000000e+00> : vector<128xf32>
    %8 = vector.multi_reduction <add>, %7, %cst_5 [0] : vector<64x128xf32> to vector<128xf32>
    %9 = vector.shape_cast %8 : vector<128xf32> to vector<1x128xf32>
    %10 = arith.addf %2, %9 : vector<1x128xf32>
    %c1_i32 = arith.constant 1 : i32
    %cst_6 = arith.constant dense<0.000000e+00> : vector<1x32xf32>
    %11 = tpu.matmul %10, %0, %cst_6 {dimension_numbers = #tpu.dot_dimension_numbers<[1], [0], [0], [1], [0, 0, 1, 1], [], []>} : vector<1x128xf32>, vector<128x32xf32>, vector<1x32xf32> -> vector<1x32xf32>
    %cst_7 = arith.constant 3.906250e-03 : f32
    %12 = vector.broadcast %cst_7 : f32 to vector<1x32xf32>
    %13 = arith.mulf %11, %12 : vector<1x32xf32>
    %cst_8 = arith.constant dense<0.000000e+00> : vector<1x128xf32>
    %14 = tpu.matmul %13, %1, %cst_8 {dimension_numbers = #tpu.dot_dimension_numbers<[1], [0], [0], [1], [0, 0, 1, 1], [], []>} : vector<1x32xf32>, vector<32x128xf32>, vector<1x128xf32> -> vector<1x128xf32>
    %cst_9 = arith.constant 0.000000e+00 : f32
    %15 = vector.broadcast %cst_9 : f32 to vector<1x128xf32>
    %c0_i32_10 = arith.constant 0 : i32
    %c64_i32_11 = arith.constant 64 : i32
    %16 = arith.muli %c0_i32_10, %c64_i32_11 : i32
    %17 = tpu.assume_multiple %16, 64 : i32
    %c0_12 = arith.constant 0 : index
    %18 = arith.index_cast %17 : i32 to index
    %c0_13 = arith.constant 0 : index
    %19 = vector.load %arg1[%c0_12, %18, %c0_13] : memref<1x64x128xf32, #tpu.memory_space<vmem>>, vector<1x64x128xf32>
    %20 = vector.shape_cast %19 : vector<1x64x128xf32> to vector<64x128xf32>
    %21 = vector.broadcast %14 : vector<1x128xf32> to vector<64x128xf32>
    %22 = arith.subf %20, %21 : vector<64x128xf32>
    %23 = arith.mulf %22, %22 : vector<64x128xf32>
    %cst_14 = arith.constant dense<0.000000e+00> : vector<128xf32>
    %24 = vector.multi_reduction <add>, %23, %cst_14 [0] : vector<64x128xf32> to vector<128xf32>
    %25 = vector.shape_cast %24 : vector<128xf32> to vector<1x128xf32>
    %26 = arith.addf %15, %25 : vector<1x128xf32>
    %c1_i32_15 = arith.constant 1 : i32
    %cst_16 = arith.constant dense<0.000000e+00> : vector<1x32xf32>
    %27 = tpu.matmul %26, %0, %cst_16 {dimension_numbers = #tpu.dot_dimension_numbers<[1], [0], [0], [1], [0, 0, 1, 1], [], []>} : vector<1x128xf32>, vector<128x32xf32>, vector<1x32xf32> -> vector<1x32xf32>
    %cst_17 = arith.constant 3.906250e-03 : f32
    %28 = vector.broadcast %cst_17 : f32 to vector<1x32xf32>
    %29 = arith.mulf %27, %28 : vector<1x32xf32>
    %cst_18 = arith.constant 9.99999974E-6 : f32
    %30 = vector.broadcast %cst_18 : f32 to vector<1x32xf32>
    %31 = arith.addf %29, %30 : vector<1x32xf32>
    %32 = math.rsqrt %31 : vector<1x32xf32>
    %cst_19 = arith.constant dense<0.000000e+00> : vector<1x128xf32>
    %33 = tpu.matmul %32, %1, %cst_19 {dimension_numbers = #tpu.dot_dimension_numbers<[1], [0], [0], [1], [0, 0, 1, 1], [], []>} : vector<1x32xf32>, vector<32x128xf32>, vector<1x128xf32> -> vector<1x128xf32>
    %c0_20 = arith.constant 0 : index
    %c0_21 = arith.constant 0 : index
    %34 = vector.load %arg2[%c0_20, %c0_21] : memref<1x128xf32, #tpu.memory_space<vmem>>, vector<1x128xf32>
    %35 = arith.mulf %33, %34 : vector<1x128xf32>
    %c0_22 = arith.constant 0 : index
    %c0_23 = arith.constant 0 : index
    %36 = vector.load %arg3[%c0_22, %c0_23] : memref<1x128xf32, #tpu.memory_space<vmem>>, vector<1x128xf32>
    %37 = arith.mulf %14, %35 : vector<1x128xf32>
    %38 = arith.subf %36, %37 : vector<1x128xf32>
    %c0_24 = arith.constant 0 : index
    %c0_25 = arith.constant 0 : index
    %39 = vector.load %arg6[%c0_24, %c0_25] : memref<128x384xbf16, #tpu.memory_space<vmem>>, vector<128x384xbf16>
    %c0_26 = arith.constant 0 : index
    %c0_27 = arith.constant 0 : index
    %40 = vector.load %arg7[%c0_26, %c0_27] : memref<1x384xf32, #tpu.memory_space<vmem>>, vector<1x384xf32>
    %c0_i32_28 = arith.constant 0 : i32
    %c64_i32_29 = arith.constant 64 : i32
    %41 = arith.muli %c0_i32_28, %c64_i32_29 : i32
    %42 = tpu.assume_multiple %41, 64 : i32
    %c0_30 = arith.constant 0 : index
    %43 = arith.index_cast %42 : i32 to index
    %c0_31 = arith.constant 0 : index
    %44 = vector.load %arg1[%c0_30, %43, %c0_31] : memref<1x64x128xf32, #tpu.memory_space<vmem>>, vector<1x64x128xf32>
    %45 = vector.shape_cast %44 : vector<1x64x128xf32> to vector<64x128xf32>
    %46 = vector.broadcast %35 : vector<1x128xf32> to vector<64x128xf32>
    %47 = arith.mulf %45, %46 : vector<64x128xf32>
    %48 = vector.broadcast %38 : vector<1x128xf32> to vector<64x128xf32>
    %49 = arith.addf %47, %48 : vector<64x128xf32>
    %50 = arith.truncf %49 : vector<64x128xf32> to vector<64x128xbf16>
    %cst_32 = arith.constant dense<0.000000e+00> : vector<64x384xf32>
    %51 = tpu.matmul %50, %39, %cst_32 {dimension_numbers = #tpu.dot_dimension_numbers<[1], [0], [0], [1], [0, 0, 1, 1], [], []>} : vector<64x128xbf16>, vector<128x384xbf16>, vector<64x384xf32> -> vector<64x384xf32>
    %52 = vector.broadcast %40 : vector<1x384xf32> to vector<64x384xf32>
    %53 = arith.addf %51, %52 : vector<64x384xf32>
    %54 = vector.extract_strided_slice %53 {offsets = [0, 0], sizes = [64, 128], strides = [1, 1]} : vector<64x384xf32> to vector<64x128xf32>
    %55 = arith.truncf %54 : vector<64x128xf32> to vector<64x128xbf16>
    %56 = arith.index_cast %42 : i32 to index
    %c0_33 = arith.constant 0 : index
    %57 = vector.load %arg11[%56, %c0_33] : memref<64x128xbf16, #tpu.memory_space<vmem>>, vector<64x128xbf16>
    tpu.vector_store %arg11[%56, %c0_33], %55 {strides = array<i32>} : memref<64x128xbf16, #tpu.memory_space<vmem>>, vector<64x128xbf16>,
    %58 = vector.extract_strided_slice %53 {offsets = [0, 128], sizes = [64, 128], strides = [1, 1]} : vector<64x384xf32> to vector<64x128xf32>
    %59 = arith.truncf %58 : vector<64x128xf32> to vector<64x128xbf16>
    %60 = arith.index_cast %42 : i32 to index
    %c0_34 = arith.constant 0 : index
    %61 = vector.load %arg12[%60, %c0_34] : memref<64x128xbf16, #tpu.memory_space<vmem>>, vector<64x128xbf16>
    tpu.vector_store %arg12[%60, %c0_34], %59 {strides = array<i32>} : memref<64x128xbf16, #tpu.memory_space<vmem>>, vector<64x128xbf16>,
    %62 = vector.extract_strided_slice %53 {offsets = [0, 256], sizes = [64, 128], strides = [1, 1]} : vector<64x384xf32> to vector<64x128xf32>
    %63 = arith.truncf %62 : vector<64x128xf32> to vector<64x128xbf16>
    %64 = arith.index_cast %42 : i32 to index
    %c0_35 = arith.constant 0 : index
    %65 = vector.load %arg14[%64, %c0_35] : memref<64x128xbf16, #tpu.memory_space<vmem>>, vector<64x128xbf16>
    tpu.vector_store %arg14[%64, %c0_35], %63 {strides = array<i32>} : memref<64x128xbf16, #tpu.memory_space<vmem>>, vector<64x128xbf16>,
    %c1_i32_36 = arith.constant 1 : i32
    %c0_37 = arith.constant 0 : index
    %c0_38 = arith.constant 0 : index
    %66 = vector.load %arg12[%c0_37, %c0_38] : memref<64x128xbf16, #tpu.memory_space<vmem>>, vector<64x128xbf16>
    %67 = tpu.transpose %66, [1, 0] : vector<64x128xbf16> -> vector<128x64xbf16>
    %c0_39 = arith.constant 0 : index
    %c0_40 = arith.constant 0 : index
    %68 = vector.load %arg13[%c0_39, %c0_40] : memref<128x64xbf16, #tpu.memory_space<vmem>>, vector<128x64xbf16>
    tpu.vector_store %arg13[%c0_39, %c0_40], %67 {strides = array<i32>} : memref<128x64xbf16, #tpu.memory_space<vmem>>, vector<128x64xbf16>,
    %c0_41 = arith.constant 0 : index
    %c0_42 = arith.constant 0 : index
    %69 = vector.load %arg8[%c0_41, %c0_42] : memref<128x128xbf16, #tpu.memory_space<vmem>>, vector<128x128xbf16>
    %c0_43 = arith.constant 0 : index
    %c0_44 = arith.constant 0 : index
    %70 = vector.load %arg9[%c0_43, %c0_44] : memref<1x128xf32, #tpu.memory_space<vmem>>, vector<1x128xf32>
    %c0_i32_45 = arith.constant 0 : i32
    %c64_i32_46 = arith.constant 64 : i32
    %71 = arith.muli %c0_i32_45, %c64_i32_46 : i32
    %72 = tpu.assume_multiple %71, 64 : i32
    %73 = arith.index_cast %72 : i32 to index
    %c0_47 = arith.constant 0 : index
    %74 = vector.load %arg11[%73, %c0_47] : memref<64x128xbf16, #tpu.memory_space<vmem>>, vector<64x128xbf16>
    %c0_48 = arith.constant 0 : index
    %c0_49 = arith.constant 0 : index
    %75 = vector.load %arg13[%c0_48, %c0_49] : memref<128x64xbf16, #tpu.memory_space<vmem>>, vector<128x64xbf16>
    %cst_50 = arith.constant dense<0.000000e+00> : vector<64x64xf32>
    %76 = tpu.matmul %74, %75, %cst_50 {dimension_numbers = #tpu.dot_dimension_numbers<[1], [0], [0], [1], [0, 0, 1, 1], [], []>} : vector<64x128xbf16>, vector<128x64xbf16>, vector<64x64xf32> -> vector<64x64xf32>
    %cst_51 = arith.constant dense<0xFF800000> : vector<64xf32>
    %77 = vector.multi_reduction <maximumf>, %76, %cst_51 [1] : vector<64x64xf32> to vector<64xf32>
    %78 = vector.shape_cast %77 : vector<64xf32> to vector<64x1xf32>
    %79 = vector.broadcast %78 : vector<64x1xf32> to vector<64x64xf32>
    %80 = arith.subf %76, %79 : vector<64x64xf32>
    %81 = math.exp %80 : vector<64x64xf32>
    %cst_52 = arith.constant dense<0.000000e+00> : vector<64xf32>
    %82 = vector.multi_reduction <add>, %81, %cst_52 [1] : vector<64x64xf32> to vector<64xf32>
    %83 = vector.shape_cast %82 : vector<64xf32> to vector<64x1xf32>
    %84 = arith.truncf %81 : vector<64x64xf32> to vector<64x64xbf16>
    %c0_53 = arith.constant 0 : index
    %c0_54 = arith.constant 0 : index
    %85 = vector.load %arg14[%c0_53, %c0_54] : memref<64x128xbf16, #tpu.memory_space<vmem>>, vector<64x128xbf16>
    %cst_55 = arith.constant dense<0.000000e+00> : vector<64x128xf32>
    %86 = tpu.matmul %84, %85, %cst_55 {dimension_numbers = #tpu.dot_dimension_numbers<[1], [0], [0], [1], [0, 0, 1, 1], [], []>} : vector<64x64xbf16>, vector<64x128xbf16>, vector<64x128xf32> -> vector<64x128xf32>
    %87 = tpu.reciprocal %83 : vector<64x1xf32> -> vector<64x1xf32>
    %88 = vector.broadcast %87 : vector<64x1xf32> to vector<64x128xf32>
    %89 = arith.mulf %86, %88 : vector<64x128xf32>
    %90 = arith.truncf %89 : vector<64x128xf32> to vector<64x128xbf16>
    %cst_56 = arith.constant dense<0.000000e+00> : vector<64x128xf32>
    %91 = tpu.matmul %90, %69, %cst_56 {dimension_numbers = #tpu.dot_dimension_numbers<[1], [0], [0], [1], [0, 0, 1, 1], [], []>} : vector<64x128xbf16>, vector<128x128xbf16>, vector<64x128xf32> -> vector<64x128xf32>
    %92 = vector.broadcast %70 : vector<1x128xf32> to vector<64x128xf32>
    %93 = arith.addf %91, %92 : vector<64x128xf32>
    %c0_57 = arith.constant 0 : index
    %94 = arith.index_cast %72 : i32 to index
    %c0_58 = arith.constant 0 : index
    %95 = vector.load %arg1[%c0_57, %94, %c0_58] : memref<1x64x128xf32, #tpu.memory_space<vmem>>, vector<1x64x128xf32>
    %96 = vector.shape_cast %95 : vector<1x64x128xf32> to vector<64x128xf32>
    %97 = arith.addf %93, %96 : vector<64x128xf32>
    %c0_59 = arith.constant 0 : index
    %98 = arith.index_cast %72 : i32 to index
    %c0_60 = arith.constant 0 : index
    %99 = vector.load %arg10[%c0_59, %98, %c0_60] : memref<1x64x128xf32, #tpu.memory_space<vmem>>, vector<1x64x128xf32>
    %100 = vector.shape_cast %99 : vector<1x64x128xf32> to vector<64x128xf32>
    %101 = vector.shape_cast %97 : vector<64x128xf32> to vector<1x64x128xf32>
    tpu.vector_store %arg10[%c0_59, %98, %c0_60], %101 {strides = array<i32>} : memref<1x64x128xf32, #tpu.memory_space<vmem>>, vector<1x64x128xf32>,
    %c1_i32_61 = arith.constant 1 : i32
    return
  }
  func.func @transform_0(%arg0: i32) -> (i32, i32, i32) {
    %c0_i32 = arith.constant 0 : i32
    %c0_i32_0 = arith.constant 0 : i32
    %c0_i32_1 = arith.constant 0 : i32
    return %arg0, %c0_i32, %c0_i32_0 : i32, i32, i32
  }
  func.func @transform_1(%arg0: i32) -> (i32, i32) {
    %c0_i32 = arith.constant 0 : i32
    %c0_i32_0 = arith.constant 0 : i32
    %c0_i32_1 = arith.constant 0 : i32
    return %c0_i32, %c0_i32_0 : i32, i32
  }
  func.func @transform_2(%arg0: i32) -> (i32, i32) {
    %c0_i32 = arith.constant 0 : i32
    %c0_i32_0 = arith.constant 0 : i32
    %c0_i32_1 = arith.constant 0 : i32
    return %c0_i32, %c0_i32_0 : i32, i32
  }
  func.func @transform_3(%arg0: i32) -> (i32, i32) {
    %c0_i32 = arith.constant 0 : i32
    %c0_i32_0 = arith.constant 0 : i32
    %c0_i32_1 = arith.constant 0 : i32
    return %c0_i32, %c0_i32_0 : i32, i32
  }
  func.func @transform_4(%arg0: i32) -> (i32, i32) {
    %c0_i32 = arith.constant 0 : i32
    %c0_i32_0 = arith.constant 0 : i32
    %c0_i32_1 = arith.constant 0 : i32
    return %c0_i32, %c0_i32_0 : i32, i32
  }
  func.func @transform_5(%arg0: i32) -> (i32, i32) {
    %c0_i32 = arith.constant 0 : i32
    %c0_i32_0 = arith.constant 0 : i32
    %c0_i32_1 = arith.constant 0 : i32
    return %c0_i32, %c0_i32_0 : i32, i32
  }
  func.func @transform_6(%arg0: i32) -> (i32, i32) {
    %c0_i32 = arith.constant 0 : i32
    %c0_i32_0 = arith.constant 0 : i32
    %c0_i32_1 = arith.constant 0 : i32
    return %c0_i32, %c0_i32_0 : i32, i32
  }
  func.func @transform_7(%arg0: i32) -> (i32, i32) {
    %c0_i32 = arith.constant 0 : i32
    %c0_i32_0 = arith.constant 0 : i32
    %c0_i32_1 = arith.constant 0 : i32
    return %c0_i32, %c0_i32_0 : i32, i32
  }
  func.func @transform_8(%arg0: i32) -> (i32, i32) {
    %c0_i32 = arith.constant 0 : i32
    %c0_i32_0 = arith.constant 0 : i32
    %c0_i32_1 = arith.constant 0 : i32
    return %c0_i32, %c0_i32_0 : i32, i32
  }
  func.func @transform_9(%arg0: i32) -> (i32, i32, i32) {
    %c0_i32 = arith.constant 0 : i32
    %c0_i32_0 = arith.constant 0 : i32
    %c0_i32_1 = arith.constant 0 : i32
    return %arg0, %c0_i32, %c0_i32_0 : i32, i32, i32
  }
}

</mosaic_0001>

<llo_original>
// kernel: vae_attention_block.1
$region0: #{vae_attention_block.1}
  #allocation0 [shape = 'u32[]', space=smem, size = 0x4, offset = 0x4, fixed_abs, tag = 'smem constant byte address 0x4 - core index']
  #allocation1 [shape = 'u32[144,128]{1,0:T(1,128)}', space=vmem, size = 0x12000, scoped, tag = 'internal scratch']
  #allocation2 [shape = 'bf16[64,128]{1,0:T(16,128)(2,1)}', space=vmem, size = 0x4000, scoped, tag = 'scratch operand']
  #allocation3 [shape = 'bf16[64,128]{1,0:T(16,128)(2,1)}', space=vmem, size = 0x4000, scoped, tag = 'scratch operand']
  #allocation4 [shape = 'bf16[128,64]{1,0:T(16,128)(2,1)}', space=vmem, size = 0x8000, scoped, tag = 'scratch operand']
  #allocation5 [shape = 'bf16[64,128]{1,0:T(16,128)(2,1)}', space=vmem, size = 0x4000, scoped, tag = 'scratch operand']
  %s0 = inlined_call_operand.vmem [shape: f32[2,64,128], index: 0, kind: input, shape index: {}]
  %s1 = inlined_call_operand.vmem [shape: f32[1,128], index: 1, kind: input, shape index: {}]
  %s2 = inlined_call_operand.vmem [shape: f32[1,128], index: 2, kind: input, shape index: {}]
  %s3 = inlined_call_operand.vmem [shape: f32[128,32], index: 3, kind: input, shape index: {}]
  %s4 = inlined_call_operand.vmem [shape: f32[32,128], index: 4, kind: input, shape index: {}]
  %s5 = inlined_call_operand.vmem [shape: bf16[128,384], index: 5, kind: input, shape index: {}]
  %s6 = inlined_call_operand.vmem [shape: f32[1,384], index: 6, kind: input, shape index: {}]
  %s7 = inlined_call_operand.vmem [shape: bf16[128,128], index: 7, kind: input, shape index: {}]
  %s8 = inlined_call_operand.vmem [shape: f32[1,128], index: 8, kind: input, shape index: {}]
  %s9 = inlined_call_operand.hbm [shape: f32[2,64,128], index: 9, kind: output, shape index: {}]
  %s10 = sld [smem:[#allocation0]]
  $region69: #{vae_attention_block.1} parent=0
    _
  %s12 = ssub.s32 1, %s10
  %s13 = scalar_select 0, %s12, %s10
  $region1: #{vae_attention_block.1} parent=0
    #allocation6 [shape = 'u8[65536]{0}', space=vmem, size = 0x10000, scoped, tag = 'output window, operand 0']
    #allocation7 [shape = 's32[2]{0}', space=sflag, size = 0x8, scoped, tag = 'scoped memory for vae_attention_block.1']
    %14 = vsyncpa [#allocation7], 0
    %s15 = scalar_lea.sflag [#allocation7], 1
    %16 = vsyncpa %s15, 0
    loop: start=0, step=1, limit=4
    $region2: #{vae_attention_block.1} parent=1 // loop_pre_header
      _
    $region3: #{vae_attention_block.1} parent=1 // loop_header
      %s18 = sphi 0, %s22
      %p19 = scmp.ge.s32.totalorder %s18, 4
      %s28 = sphi 0, %s30
      %s31 = sphi 0, %s28
      %s32 = sphi 0, %s31
      %s48 = sphi 0, %s32
      %s52 = sphi 0, %s52
      %s54 = sphi 0, %s52
      %s55 = sphi 0, %s54
      %s69 = sphi 0, %s55
      %s73 = sphi 0, %s73
      %s75 = sphi 0, %s73
      %s76 = sphi 0, %s75
      %s90 = sphi 0, %s76
      %s94 = sphi 0, %s94
      %s96 = sphi 0, %s94
      %s97 = sphi 0, %s96
      %s111 = sphi 0, %s97
      %s115 = sphi 0, %s115
      %s117 = sphi 0, %s115
      %s118 = sphi 0, %s117
      %s132 = sphi 0, %s118
      %s136 = sphi 0, %s136
      %s138 = sphi 0, %s136
      %s139 = sphi 0, %s138
      %s153 = sphi 0, %s139
      %s157 = sphi 0, %s157
      %s159 = sphi 0, %s157
      %s160 = sphi 0, %s159
      %s174 = sphi 0, %s160
      %s178 = sphi 0, %s178
      %s180 = sphi 0, %s178
      %s181 = sphi 0, %s180
      %s195 = sphi 0, %s181
      %s199 = sphi 0, %s199
      %s201 = sphi 0, %s199
      %s202 = sphi 0, %s201
      %s216 = sphi 0, %s202
      %s222 = sphi 0, %s224
      %s225 = sphi 0, %s222
      %s226 = sphi 0, %s225
      %s242 = sphi 0, %s226
    $region4: #{vae_attention_block.1} parent=1 // loop_header_branch
      %21 = sbr.rel (%p19) target = $region8
    $region5: #{vae_attention_block.1} parent=1 // loop_body
      %s23 = ssub.s32 %s18, 1
      %s24 = ssub.s32 %s18, 2
      %s25 = sadd.s32 %s18, 1
      %s26 = ssub.s32 %s18, %s25
      %p27 = scmp.eq.s32.totalorder %s26, 0
      %s29 = sadd.s32 %s28, 1
      %s30 = scalar_select %p27, %s28, %s29
      %p33 = pneg %p27
      %p34 = scmp.eq.s32.totalorder %s18, 1
      %p35 = por %p33, %p34
      %p36 = scmp.ne.s32.totalorder %s28, %s31
      %p37 = scmp.eq.s32.totalorder %s18, 0
      %p38 = por %p36, %p37
      %p39 = scmp.ne.s32.totalorder %s28, %s31
      %p40 = scmp.eq.s32.totalorder %s23, 1
      %p41 = por %p39, %p40
      %p42 = scmp.ne.s32.totalorder %s31, %s32
      %p43 = scmp.eq.s32.totalorder %s23, 0
      %p44 = por %p42, %p43
      %p45 = scmp.ne.s32.totalorder %s31, %s32
      %p46 = scmp.eq.s32.totalorder %s24, 1
      %p47 = por %p45, %p46
      %p49 = scmp.ne.s32.totalorder %s32, %s48
      %p50 = scmp.eq.s32.totalorder %s24, 0
      %p51 = por %p49, %p50
      %s53 = sadd.s32 %s52, 1
      %p56 = scmp.eq.s32.totalorder %s18, 1
      %p57 = scmp.ne.s32.totalorder %s52, %s54
      %p58 = scmp.eq.s32.totalorder %s18, 0
      %p59 = por %p57, %p58
      %p60 = scmp.ne.s32.totalorder %s52, %s54
      %p61 = scmp.eq.s32.totalorder %s23, 1
      %p62 = por %p60, %p61
      %p63 = scmp.ne.s32.totalorder %s54, %s55
      %p64 = scmp.eq.s32.totalorder %s23, 0
      %p65 = por %p63, %p64
      %p66 = scmp.ne.s32.totalorder %s54, %s55
      %p67 = scmp.eq.s32.totalorder %s24, 1
      %p68 = por %p66, %p67
      %p70 = scmp.ne.s32.totalorder %s55, %s69
      %p71 = scmp.eq.s32.totalorder %s24, 0
      %p72 = por %p70, %p71
      %s74 = sadd.s32 %s73, 1
      %p77 = scmp.eq.s32.totalorder %s18, 1
      %p78 = scmp.ne.s32.totalorder %s73, %s75
      %p79 = scmp.eq.s32.totalorder %s18, 0
      %p80 = por %p78, %p79
      %p81 = scmp.ne.s32.totalorder %s73, %s75
      %p82 = scmp.eq.s32.totalorder %s23, 1
      %p83 = por %p81, %p82
      %p84 = scmp.ne.s32.totalorder %s75, %s76
      %p85 = scmp.eq.s32.totalorder %s23, 0
      %p86 = por %p84, %p85
      %p87 = scmp.ne.s32.totalorder %s75, %s76
      %p88 = scmp.eq.s32.totalorder %s24, 1
      %p89 = por %p87, %p88
      %p91 = scmp.ne.s32.totalorder %s76, %s90
      %p92 = scmp.eq.s32.totalorder %s24, 0
      %p93 = por %p91, %p92
      %s95 = sadd.s32 %s94, 1
      %p98 = scmp.eq.s32.totalorder %s18, 1
      %p99 = scmp.ne.s32.totalorder %s94, %s96
      %p100 = scmp.eq.s32.totalorder %s18, 0
      %p101 = por %p99, %p100
      %p102 = scmp.ne.s32.totalorder %s94, %s96
      %p103 = scmp.eq.s32.totalorder %s23, 1
      %p104 = por %p102, %p103
      %p105 = scmp.ne.s32.totalorder %s96, %s97
      %p106 = scmp.eq.s32.totalorder %s23, 0
      %p107 = por %p105, %p106
      %p108 = scmp.ne.s32.totalorder %s96, %s97
      %p109 = scmp.eq.s32.totalorder %s24, 1
      %p110 = por %p108, %p109
      %p112 = scmp.ne.s32.totalorder %s97, %s111
      %p113 = scmp.eq.s32.totalorder %s24, 0
      %p114 = por %p112, %p113
      %s116 = sadd.s32 %s115, 1
      %p119 = scmp.eq.s32.totalorder %s18, 1
      %p120 = scmp.ne.s32.totalorder %s115, %s117
      %p121 = scmp.eq.s32.totalorder %s18, 0
      %p122 = por %p120, %p121
      %p123 = scmp.ne.s32.totalorder %s115, %s117
      %p124 = scmp.eq.s32.totalorder %s23, 1
      %p125 = por %p123, %p124
      %p126 = scmp.ne.s32.totalorder %s117, %s118
      %p127 = scmp.eq.s32.totalorder %s23, 0
      %p128 = por %p126, %p127
      %p129 = scmp.ne.s32.totalorder %s117, %s118
      %p130 = scmp.eq.s32.totalorder %s24, 1
      %p131 = por %p129, %p130
      %p133 = scmp.ne.s32.totalorder %s118, %s132
      %p134 = scmp.eq.s32.totalorder %s24, 0
      %p135 = por %p133, %p134
      %s137 = sadd.s32 %s136, 1
      %p140 = scmp.eq.s32.totalorder %s18, 1
      %p141 = scmp.ne.s32.totalorder %s136, %s138
      %p142 = scmp.eq.s32.totalorder %s18, 0
      %p143 = por %p141, %p142
      %p144 = scmp.ne.s32.totalorder %s136, %s138
      %p145 = scmp.eq.s32.totalorder %s23, 1
      %p146 = por %p144, %p145
      %p147 = scmp.ne.s32.totalorder %s138, %s139
      %p148 = scmp.eq.s32.totalorder %s23, 0
      %p149 = por %p147, %p148
      %p150 = scmp.ne.s32.totalorder %s138, %s139
      %p151 = scmp.eq.s32.totalorder %s24, 1
      %p152 = por %p150, %p151
      %p154 = scmp.ne.s32.totalorder %s139, %s153
      %p155 = scmp.eq.s32.totalorder %s24, 0
      %p156 = por %p154, %p155
      %s158 = sadd.s32 %s157, 1
      %p161 = scmp.eq.s32.totalorder %s18, 1
      %p162 = scmp.ne.s32.totalorder %s157, %s159
      %p163 = scmp.eq.s32.totalorder %s18, 0
      %p164 = por %p162, %p163
      %p165 = scmp.ne.s32.totalorder %s157, %s159
      %p166 = scmp.eq.s32.totalorder %s23, 1
      %p167 = por %p165, %p166
      %p168 = scmp.ne.s32.totalorder %s159, %s160
      %p169 = scmp.eq.s32.totalorder %s23, 0
      %p170 = por %p168, %p169
      %p171 = scmp.ne.s32.totalorder %s159, %s160
      %p172 = scmp.eq.s32.totalorder %s24, 1
      %p173 = por %p171, %p172
      %p175 = scmp.ne.s32.totalorder %s160, %s174
      %p176 = scmp.eq.s32.totalorder %s24, 0
      %p177 = por %p175, %p176
      %s179 = sadd.s32 %s178, 1
      %p182 = scmp.eq.s32.totalorder %s18, 1
      %p183 = scmp.ne.s32.totalorder %s178, %s180
      %p184 = scmp.eq.s32.totalorder %s18, 0
      %p185 = por %p183, %p184
      %p186 = scmp.ne.s32.totalorder %s178, %s180
      %p187 = scmp.eq.s32.totalorder %s23, 1
      %p188 = por %p186, %p187
      %p189 = scmp.ne.s32.totalorder %s180, %s181
      %p190 = scmp.eq.s32.totalorder %s23, 0
      %p191 = por %p189, %p190
      %p192 = scmp.ne.s32.totalorder %s180, %s181
      %p193 = scmp.eq.s32.totalorder %s24, 1
      %p194 = por %p192, %p193
      %p196 = scmp.ne.s32.totalorder %s181, %s195
      %p197 = scmp.eq.s32.totalorder %s24, 0
      %p198 = por %p196, %p197
      %s200 = sadd.s32 %s199, 1
      %p203 = scmp.eq.s32.totalorder %s18, 1
      %p204 = scmp.ne.s32.totalorder %s199, %s201
      %p205 = scmp.eq.s32.totalorder %s18, 0
      %p206 = por %p204, %p205
      %p207 = scmp.ne.s32.totalorder %s199, %s201
      %p208 = scmp.eq.s32.totalorder %s23, 1
      %p209 = por %p207, %p208
      %p210 = scmp.ne.s32.totalorder %s201, %s202
      %p211 = scmp.eq.s32.totalorder %s23, 0
      %p212 = por %p210, %p211
      %p213 = scmp.ne.s32.totalorder %s201, %s202
      %p214 = scmp.eq.s32.totalorder %s24, 1
      %p215 = por %p213, %p214
      %p217 = scmp.ne.s32.totalorder %s202, %s216
      %p218 = scmp.eq.s32.totalorder %s24, 0
      %p219 = por %p217, %p218
      %s220 = ssub.s32 %s18, %s25
      %p221 = scmp.eq.s32.totalorder %s220, 0
      %s223 = sadd.s32 %s222, 1
      %s224 = scalar_select %p221, %s222, %s223
      %p227 = pneg %p221
      %p228 = scmp.eq.s32.totalorder %s18, 1
      %p229 = por %p227, %p228
      %p230 = scmp.ne.s32.totalorder %s222, %s225
      %p231 = scmp.eq.s32.totalorder %s18, 0
      %p232 = por %p230, %p231
      %p233 = scmp.ne.s32.totalorder %s222, %s225
      %p234 = scmp.eq.s32.totalorder %s23, 1
      %p235 = por %p233, %p234
      %p236 = scmp.ne.s32.totalorder %s225, %s226
      %p237 = scmp.eq.s32.totalorder %s23, 0
      %p238 = por %p236, %p237
      %p239 = scmp.ne.s32.totalorder %s225, %s226
      %p240 = scmp.eq.s32.totalorder %s24, 1
      %p241 = por %p239, %p240
      %p243 = scmp.ne.s32.totalorder %s226, %s242
      %p244 = scmp.eq.s32.totalorder %s24, 0
      %p245 = por %p243, %p244
      %p246 = scmp.le.s32.totalorder 1, %s18
      %p247 = scmp.lt.s32.totalorder %s18, 3
      %p248 = pnand %p246, %p247
      %p249 = pneg %p248
      // Predicated region
      $region9: #{vae_attention_block.1} parent=5 // pred_check
        _
      $region10: #{vae_attention_block.1} parent=5 // pred_check_branch
        %251 = sbr.rel (%p248) target = $region12
      $region11: #{vae_attention_block.1} parent=5 // pred_region
        %s252 = ssub.s32 %s18, 1
        // Predicated region
        $region13: #{vae_attention_block.1} parent=11 // pred_check
          %p253 = pneg %p65
        $region14: #{vae_attention_block.1} parent=11 // pred_check_branch
          %255 = sbr.rel (%p253) target = $region16
        $region15: #{vae_attention_block.1} parent=11 // pred_region
          _
        $region16: #{vae_attention_block.1} parent=11 // pred_fallthru
          _
        // Predicated region
        $region17: #{vae_attention_block.1} parent=11 // pred_check
          %p256 = pneg %p86
        $region18: #{vae_attention_block.1} parent=11 // pred_check_branch
          %258 = sbr.rel (%p256) target = $region20
        $region19: #{vae_attention_block.1} parent=11 // pred_region
          _
        $region20: #{vae_attention_block.1} parent=11 // pred_fallthru
          _
        // Predicated region
        $region21: #{vae_attention_block.1} parent=11 // pred_check
          %p259 = pneg %p107
        $region22: #{vae_attention_block.1} parent=11 // pred_check_branch
          %261 = sbr.rel (%p259) target = $region24
        $region23: #{vae_attention_block.1} parent=11 // pred_region
          _
        $region24: #{vae_attention_block.1} parent=11 // pred_fallthru
          _
        // Predicated region
        $region25: #{vae_attention_block.1} parent=11 // pred_check
          %p262 = pneg %p128
        $region26: #{vae_attention_block.1} parent=11 // pred_check_branch
          %264 = sbr.rel (%p262) target = $region28
        $region27: #{vae_attention_block.1} parent=11 // pred_region
          _
        $region28: #{vae_attention_block.1} parent=11 // pred_fallthru
          _
        // Predicated region
        $region29: #{vae_attention_block.1} parent=11 // pred_check
          %p265 = pneg %p149
        $region30: #{vae_attention_block.1} parent=11 // pred_check_branch
          %267 = sbr.rel (%p265) target = $region32
        $region31: #{vae_attention_block.1} parent=11 // pred_region
          _
        $region32: #{vae_attention_block.1} parent=11 // pred_fallthru
          _
        // Predicated region
        $region33: #{vae_attention_block.1} parent=11 // pred_check
          %p268 = pneg %p170
        $region34: #{vae_attention_block.1} parent=11 // pred_check_branch
          %270 = sbr.rel (%p268) target = $region36
        $region35: #{vae_attention_block.1} parent=11 // pred_region
          _
        $region36: #{vae_attention_block.1} parent=11 // pred_fallthru
          _
        // Predicated region
        $region37: #{vae_attention_block.1} parent=11 // pred_check
          %p271 = pneg %p191
        $region38: #{vae_attention_block.1} parent=11 // pred_check_branch
          %273 = sbr.rel (%p271) target = $region40
        $region39: #{vae_attention_block.1} parent=11 // pred_region
          _
        $region40: #{vae_attention_block.1} parent=11 // pred_fallthru
          _
        // Predicated region
        $region41: #{vae_attention_block.1} parent=11 // pred_check
          %p274 = pneg %p212
        $region42: #{vae_attention_block.1} parent=11 // pred_check_branch
          %276 = sbr.rel (%p274) target = $region44
        $region43: #{vae_attention_block.1} parent=11 // pred_region
          _
        $region44: #{vae_attention_block.1} parent=11 // pred_fallthru
          _
      $region12: #{vae_attention_block.1} parent=5 // pred_fallthru
        _
      %p277 = scmp.lt.s32.totalorder %s18, 2
      // Predicated region
      $region45: #{vae_attention_block.1} parent=5 // pred_check
        %p278 = pneg %p277
      $region46: #{vae_attention_block.1} parent=5 // pred_check_branch
        %280 = sbr.rel (%p278) target = $region48
      $region47: #{vae_attention_block.1} parent=5 // pred_region
        // Predicated region
        $region49: #{vae_attention_block.1} parent=47 // pred_check
          %p281 = pneg %p38
        $region50: #{vae_attention_block.1} parent=47 // pred_check_branch
          %283 = sbr.rel (%p281) target = $region52
        $region51: #{vae_attention_block.1} parent=47 // pred_region
          %p284 = scmp.lt.s32.totalorder %s18, 1
          %s285 = scalar_select %p284, %s18, 1
          %s286 = smul.addr %s285, 8
          %s287 = smul.addr %s286, 8
          %s288 = scalar_lea.vmem %s0, %s287
        $region52: #{vae_attention_block.1} parent=47 // pred_fallthru
          _
      $region48: #{vae_attention_block.1} parent=5 // pred_fallthru
        _
      %p289 = scmp.le.s32.totalorder 1, %s18
      %p290 = scmp.lt.s32.totalorder %s18, 3
      %p291 = pnand %p289, %p290
      %p292 = pneg %p291
      // Predicated region
      $region53: #{vae_attention_block.1} parent=5 // pred_check
        _
      $region54: #{vae_attention_block.1} parent=5 // pred_check_branch
        %294 = sbr.rel (%p291) target = $region56
      $region55: #{vae_attention_block.1} parent=5 // pred_region
        %s295 = ssub.s32 %s18, 1
        %p296 = scmp.lt.s32.totalorder %s23, 1
        %s297 = scalar_select %p296, %s23, 1
        %s298 = smul.addr %s297, 8
        %s299 = smul.addr %s298, 8
        %s300 = scalar_lea.vmem %s0, %s299
        %p301 = pneg %p44
        %p302 = pneg %p41
        %p303 = pneg %p65
        %p304 = pneg %p62
        %p305 = pneg %p86
        %p306 = pneg %p83
        %p307 = pneg %p107
        %p308 = pneg %p104
        %p309 = pneg %p128
        %p310 = pneg %p125
        %p311 = pneg %p149
        %p312 = pneg %p146
        %p313 = pneg %p170
        %p314 = pneg %p167
        %p315 = pneg %p191
        %p316 = pneg %p188
        %p317 = pneg %p212
        %p318 = pneg %p209
        %p319 = pneg %p238
        %p320 = pneg %p235
        %s321 = sand.u32 %s225, 1
        %s322 = scalar_lea.sflag [#allocation7], %s321
        %s323 = sand.u32 %s225, 1
        %s324 = smul.addr %s323, 64
        %s325 = scalar_lea.vmem [#allocation6], %s324
        %p326 = scmp.lt.s32.totalorder %s23, 1
        %s327 = scalar_select %p326, %s23, 1
        %s328 = smul.addr %s327, 8
        %s329 = smul.addr %s328, 8
        %s330 = scalar_lea.vmem %s0, %s329
        %v332 = vld [vmem:[%s3] sm:$0xff]
        %v333 = vld [vmem:[%s3 + $0x8] sm:$0xff]
        %v334 = vld [vmem:[%s3 + $0x10] sm:$0xff]
        %v335 = vld [vmem:[%s3 + $0x18] sm:$0xff]
        %v336 = vld [vmem:[%s3 + $0x20] sm:$0xff]
        %v337 = vld [vmem:[%s3 + $0x28] sm:$0xff]
        %v338 = vld [vmem:[%s3 + $0x30] sm:$0xff]
        %v339 = vld [vmem:[%s3 + $0x38] sm:$0xff]
        %v340 = vld [vmem:[%s3 + $0x40] sm:$0xff]
        %v341 = vld [vmem:[%s3 + $0x48] sm:$0xff]
        %v342 = vld [vmem:[%s3 + $0x50] sm:$0xff]
        %v343 = vld [vmem:[%s3 + $0x58] sm:$0xff]
        %v344 = vld [vmem:[%s3 + $0x60] sm:$0xff]
        %v345 = vld [vmem:[%s3 + $0x68] sm:$0xff]
        %v346 = vld [vmem:[%s3 + $0x70] sm:$0xff]
        %v347 = vld [vmem:[%s3 + $0x78] sm:$0xff]
        %v348 = vld [vmem:[%s4] sm:$0xff]
        %v349 = vld [vmem:[%s4 + $0x8] sm:$0xff]
        %v350 = vld [vmem:[%s4 + $0x10] sm:$0xff]
        %v351 = vld [vmem:[%s4 + $0x18] sm:$0xff]
        %v352 = vld [vmem:[%s330] sm:$0xff]
        %v353 = vld [vmem:[%s330 + $0x8] sm:$0xff]
        %v354 = vld [vmem:[%s330 + $0x10] sm:$0xff]
        %v355 = vld [vmem:[%s330 + $0x18] sm:$0xff]
        %v356 = vld [vmem:[%s330 + $0x20] sm:$0xff]
        %v357 = vld [vmem:[%s330 + $0x28] sm:$0xff]
        %v358 = vld [vmem:[%s330 + $0x30] sm:$0xff]
        %v359 = vld [vmem:[%s330 + $0x38] sm:$0xff]
        %v360 = vadd.f32 %v352, %v353
        %v361 = vadd.f32 %v360, %v354
        %v362 = vadd.f32 %v361, %v355
        %v363 = vadd.f32 %v362, %v356
        %v364 = vadd.f32 %v363, %v357
        %v365 = vadd.f32 %v364, %v358
        %v366 = vadd.f32 %v365, %v359
        %v367 = vrot.slane %v366, 4
        %v368 = vadd.f32 %v366, %v367
        %v369 = vrot.slane %v368, 2
        %v370 = vadd.f32 %v368, %v369
        %v371 = vrot.slane %v370, 1
        %v372 = vadd.f32 %v370, %v371
        %v373 = vadd.f32 %v372, 0.0
        %374 = vmatprep.subr.mxu0 0.0
        %375 = vmatpush1.msra.mxu0 %v332
        %376 = vmatprep.subr.mxu0 0.0
        %377 = vmatpush1.msra.mxu0 %v333
        %378 = vmatprep.subr.mxu0 0.0
        %379 = vmatpush1.msra.mxu0 %v334
        %380 = vmatprep.subr.mxu0 0.0
        %381 = vmatpush1.msra.mxu0 %v335
        %382 = vmatprep.subr.mxu0 0.0
        %383 = vmatpush1.msra.mxu0 %v336
        %384 = vmatprep.subr.mxu0 0.0
        %385 = vmatpush1.msra.mxu0 %v337
        %386 = vmatprep.subr.mxu0 0.0
        %387 = vmatpush1.msra.mxu0 %v338
        %388 = vmatprep.subr.mxu0 0.0
        %389 = vmatpush1.msra.mxu0 %v339
        %390 = vmatprep.subr.mxu0 0.0
        %391 = vmatpush1.msra.mxu0 %v340
        %392 = vmatprep.subr.mxu0 0.0
        %393 = vmatpush1.msra.mxu0 %v341
        %394 = vmatprep.subr.mxu0 0.0
        %395 = vmatpush1.msra.mxu0 %v342
        %396 = vmatprep.subr.mxu0 0.0
        %397 = vmatpush1.msra.mxu0 %v343
        %398 = vmatprep.subr.mxu0 0.0
        %399 = vmatpush1.msra.mxu0 %v344
        %400 = vmatprep.subr.mxu0 0.0
        %401 = vmatpush1.msra.mxu0 %v345
        %402 = vmatprep.subr.mxu0 0.0
        %403 = vmatpush1.msra.mxu0 %v346
        %404 = vmatprep.subr.mxu0 0.0
        %405 = vmatpush1.msra.mxu0 %v347
        %406 = vmatprep.subr.mxu0 0.0
        %407 = vmatpush1.msra.mxu0 0.0
        %408 = vmatprep.subr.mxu0 0.0
        %409 = vmatpush1.msra.mxu0 0.0
        %410 = vmatprep.subr.mxu0 0.0
        %411 = vmatpush1.msra.mxu0 0.0
        %412 = vmatprep.subr.mxu0 0.0
        %413 = vmatpush1.msra.mxu0 0.0
        %414 = vmatprep.subr.mxu0 0.0
        %415 = vmatpush1.msra.mxu0 0.0
        %416 = vmatprep.subr.mxu0 0.0
        %417 = vmatpush1.msra.mxu0 0.0
        %418 = vmatprep.subr.mxu0 0.0
        %419 = vmatpush1.msra.mxu0 0.0
        %420 = vmatprep.subr.mxu0 0.0
        %421 = vmatpush1.msra.mxu0 0.0
        %422 = vmatprep.subr.mxu0 0.0
        %423 = vmatpush1.msra.mxu0 0.0
        %424 = vmatprep.subr.mxu0 0.0
        %425 = vmatpush1.msra.mxu0 0.0
        %426 = vmatprep.subr.mxu0 0.0
        %427 = vmatpush1.msra.mxu0 0.0
        %428 = vmatprep.subr.mxu0 0.0
        %429 = vmatpush1.msra.mxu0 0.0
        %430 = vmatprep.subr.mxu0 0.0
        %431 = vmatpush1.msra.mxu0 0.0
        %432 = vmatprep.subr.mxu0 0.0
        %433 = vmatpush1.msra.mxu0 0.0
        %434 = vmatprep.subr.mxu0 0.0
        %435 = vmatpush1.msra.mxu0 0.0
        %436 = vmatprep.subr.mxu0 0.0
        %437 = vmatpush1.msra.mxu0 0.0
        %438 = vmatprep.mubr.f32.mxu0 0.0
        %439 = vmatmul.mubr.f32.gmra.mrb[0].mxu0 %v373
        %v440 = vpop.f32.mrb[0].mxu0
        %v441 = vadd.f32 0.0, %v440
        %v442 = vpop.f32.mrb[0].mxu0
        %443 = vdwg.mxu0
        %v444 = vmul.f32 %v441, 0.00390625
        %vm445 = vcmask 261120
        %v447 = vsel %vm445, %v444, 0
        %449 = vmatprep.subr.mxu0 0.0
        %450 = vmatpush1.msra.mxu0 %v348
        %451 = vmatprep.subr.mxu0 0.0
        %452 = vmatpush1.msra.mxu0 %v349
        %453 = vmatprep.subr.mxu0 0.0
        %454 = vmatpush1.msra.mxu0 %v350
        %455 = vmatprep.subr.mxu0 0.0
        %456 = vmatpush1.msra.mxu0 %v351
        %457 = vmatprep.subr.mxu0 0.0
        %458 = vmatpush1.msra.mxu0 0.0
        %459 = vmatprep.subr.mxu0 0.0
        %460 = vmatpush1.msra.mxu0 0.0
        %461 = vmatprep.subr.mxu0 0.0
        %462 = vmatpush1.msra.mxu0 0.0
        %463 = vmatprep.subr.mxu0 0.0
        %464 = vmatpush1.msra.mxu0 0.0
        %465 = vmatprep.subr.mxu0 0.0
        %466 = vmatpush1.msra.mxu0 0.0
        %467 = vmatprep.subr.mxu0 0.0
        %468 = vmatpush1.msra.mxu0 0.0
        %469 = vmatprep.subr.mxu0 0.0
        %470 = vmatpush1.msra.mxu0 0.0
        %471 = vmatprep.subr.mxu0 0.0
        %472 = vmatpush1.msra.mxu0 0.0
        %473 = vmatprep.subr.mxu0 0.0
        %474 = vmatpush1.msra.mxu0 0.0
        %475 = vmatprep.subr.mxu0 0.0
        %476 = vmatpush1.msra.mxu0 0.0
        %477 = vmatprep.subr.mxu0 0.0
        %478 = vmatpush1.msra.mxu0 0.0
        %479 = vmatprep.subr.mxu0 0.0
        %480 = vmatpush1.msra.mxu0 0.0
        %481 = vmatprep.subr.mxu0 0.0
        %482 = vmatpush1.msra.mxu0 0.0
        %483 = vmatprep.subr.mxu0 0.0
        %484 = vmatpush1.msra.mxu0 0.0
        %485 = vmatprep.subr.mxu0 0.0
        %486 = vmatpush1.msra.mxu0 0.0
        %487 = vmatprep.subr.mxu0 0.0
        %488 = vmatpush1.msra.mxu0 0.0
        %489 = vmatprep.subr.mxu0 0.0
        %490 = vmatpush1.msra.mxu0 0.0
        %491 = vmatprep.subr.mxu0 0.0
        %492 = vmatpush1.msra.mxu0 0.0
        %493 = vmatprep.subr.mxu0 0.0
        %494 = vmatpush1.msra.mxu0 0.0
        %495 = vmatprep.subr.mxu0 0.0
        %496 = vmatpush1.msra.mxu0 0.0
        %497 = vmatprep.subr.mxu0 0.0
        %498 = vmatpush1.msra.mxu0 0.0
        %499 = vmatprep.subr.mxu0 0.0
        %500 = vmatpush1.msra.mxu0 0.0
        %501 = vmatprep.subr.mxu0 0.0
        %502 = vmatpush1.msra.mxu0 0.0
        %503 = vmatprep.subr.mxu0 0.0
        %504 = vmatpush1.msra.mxu0 0.0
        %505 = vmatprep.subr.mxu0 0.0
        %506 = vmatpush1.msra.mxu0 0.0
        %507 = vmatprep.subr.mxu0 0.0
        %508 = vmatpush1.msra.mxu0 0.0
        %509 = vmatprep.subr.mxu0 0.0
        %510 = vmatpush1.msra.mxu0 0.0
        %511 = vmatprep.subr.mxu0 0.0
        %512 = vmatpush1.msra.mxu0 0.0
        %513 = vmatprep.mubr.f32.mxu0 0.0
        %514 = vmatmul.mubr.f32.gmra.mrb[0].mxu0 %v447
        %v515 = vpop.f32.mrb[0].mxu0
        %v516 = vadd.f32 0.0, %v515
        %v517 = vpop.f32.mrb[0].mxu0
        %518 = vdwg.mxu0
        %v519 = vlaneseq
        %v520 = vshrl.u32 %v519, 7
        %v521 = vsub.s32 0, %v520
        %v522 = vrot.slane %v516, %v521
        %v523 = vsub.f32 %v352, %v522
        %v524 = vsub.f32 %v353, %v522
        %v525 = vsub.f32 %v354, %v522
        %v526 = vsub.f32 %v355, %v522
        %v527 = vsub.f32 %v356, %v522
        %v528 = vsub.f32 %v357, %v522
        %v529 = vsub.f32 %v358, %v522
        %v530 = vsub.f32 %v359, %v522
        %v531 = vmul.f32 %v523, %v523
        %v532 = vmul.f32 %v524, %v524
        %v533 = vmul.f32 %v525, %v525
        %v534 = vmul.f32 %v526, %v526
        %v535 = vmul.f32 %v527, %v527
        %v536 = vmul.f32 %v528, %v528
        %v537 = vmul.f32 %v529, %v529
        %v538 = vmul.f32 %v530, %v530
        %v539 = vadd.f32 %v531, %v532
        %v540 = vadd.f32 %v539, %v533
        %v541 = vadd.f32 %v540, %v534
        %v542 = vadd.f32 %v541, %v535
        %v543 = vadd.f32 %v542, %v536
        %v544 = vadd.f32 %v543, %v537
        %v545 = vadd.f32 %v544, %v538
        %v546 = vrot.slane %v545, 4
        %v547 = vadd.f32 %v545, %v546
        %v548 = vrot.slane %v547, 2
        %v549 = vadd.f32 %v547, %v548
        %v550 = vrot.slane %v549, 1
        %v551 = vadd.f32 %v549, %v550
        %v552 = vadd.f32 %v551, 0.0
        %553 = vmatprep.subr.mxu0 0.0
        %554 = vmatpush1.msra.mxu0 %v332
        %555 = vmatprep.subr.mxu0 0.0
        %556 = vmatpush1.msra.mxu0 %v333
        %557 = vmatprep.subr.mxu0 0.0
        %558 = vmatpush1.msra.mxu0 %v334
        %559 = vmatprep.subr.mxu0 0.0
        %560 = vmatpush1.msra.mxu0 %v335
        %561 = vmatprep.subr.mxu0 0.0
        %562 = vmatpush1.msra.mxu0 %v336
        %563 = vmatprep.subr.mxu0 0.0
        %564 = vmatpush1.msra.mxu0 %v337
        %565 = vmatprep.subr.mxu0 0.0
        %566 = vmatpush1.msra.mxu0 %v338
        %567 = vmatprep.subr.mxu0 0.0
        %568 = vmatpush1.msra.mxu0 %v339
        %569 = vmatprep.subr.mxu0 0.0
        %570 = vmatpush1.msra.mxu0 %v340
        %571 = vmatprep.subr.mxu0 0.0
        %572 = vmatpush1.msra.mxu0 %v341
        %573 = vmatprep.subr.mxu0 0.0
        %574 = vmatpush1.msra.mxu0 %v342
        %575 = vmatprep.subr.mxu0 0.0
        %576 = vmatpush1.msra.mxu0 %v343
        %577 = vmatprep.subr.mxu0 0.0
        %578 = vmatpush1.msra.mxu0 %v344
        %579 = vmatprep.subr.mxu0 0.0
        %580 = vmatpush1.msra.mxu0 %v345
        %581 = vmatprep.subr.mxu0 0.0
        %582 = vmatpush1.msra.mxu0 %v346
        %583 = vmatprep.subr.mxu0 0.0
        %584 = vmatpush1.msra.mxu0 %v347
        %585 = vmatprep.subr.mxu0 0.0
        %586 = vmatpush1.msra.mxu0 0.0
        %587 = vmatprep.subr.mxu0 0.0
        %588 = vmatpush1.msra.mxu0 0.0
        %589 = vmatprep.subr.mxu0 0.0
        %590 = vmatpush1.msra.mxu0 0.0
        %591 = vmatprep.subr.mxu0 0.0
        %592 = vmatpush1.msra.mxu0 0.0
        %593 = vmatprep.subr.mxu0 0.0
        %594 = vmatpush1.msra.mxu0 0.0
        %595 = vmatprep.subr.mxu0 0.0
        %596 = vmatpush1.msra.mxu0 0.0
        %597 = vmatprep.subr.mxu0 0.0
        %598 = vmatpush1.msra.mxu0 0.0
        %599 = vmatprep.subr.mxu0 0.0
        %600 = vmatpush1.msra.mxu0 0.0
        %601 = vmatprep.subr.mxu0 0.0
        %602 = vmatpush1.msra.mxu0 0.0
        %603 = vmatprep.subr.mxu0 0.0
        %604 = vmatpush1.msra.mxu0 0.0
        %605 = vmatprep.subr.mxu0 0.0
        %606 = vmatpush1.msra.mxu0 0.0
        %607 = vmatprep.subr.mxu0 0.0
        %608 = vmatpush1.msra.mxu0 0.0
        %609 = vmatprep.subr.mxu0 0.0
        %610 = vmatpush1.msra.mxu0 0.0
        %611 = vmatprep.subr.mxu0 0.0
        %612 = vmatpush1.msra.mxu0 0.0
        %613 = vmatprep.subr.mxu0 0.0
        %614 = vmatpush1.msra.mxu0 0.0
        %615 = vmatprep.subr.mxu0 0.0
        %616 = vmatpush1.msra.mxu0 0.0
        %617 = vmatprep.mubr.f32.mxu0 0.0
        %618 = vmatmul.mubr.f32.gmra.mrb[0].mxu0 %v552
        %v619 = vpop.f32.mrb[0].mxu0
        %v620 = vadd.f32 0.0, %v619
        %v621 = vpop.f32.mrb[0].mxu0
        %622 = vdwg.mxu0
        %v623 = vmul.f32 %v620, 0.00390625
        %v624 = vadd.f32 %v623, 1e-05
        %v625 = vrsqrt.pop %v624
        %v627 = vsel %vm445, %v625, 0
        %629 = vmatprep.subr.mxu0 0.0
        %630 = vmatpush1.msra.mxu0 %v348
        %631 = vmatprep.subr.mxu0 0.0
        %632 = vmatpush1.msra.mxu0 %v349
        %633 = vmatprep.subr.mxu0 0.0
        %634 = vmatpush1.msra.mxu0 %v350
        %635 = vmatprep.subr.mxu0 0.0
        %636 = vmatpush1.msra.mxu0 %v351
        %637 = vmatprep.subr.mxu0 0.0
        %638 = vmatpush1.msra.mxu0 0.0
        %639 = vmatprep.subr.mxu0 0.0
        %640 = vmatpush1.msra.mxu0 0.0
        %641 = vmatprep.subr.mxu0 0.0
        %642 = vmatpush1.msra.mxu0 0.0
        %643 = vmatprep.subr.mxu0 0.0
        %644 = vmatpush1.msra.mxu0 0.0
        %645 = vmatprep.subr.mxu0 0.0
        %646 = vmatpush1.msra.mxu0 0.0
        %647 = vmatprep.subr.mxu0 0.0
        %648 = vmatpush1.msra.mxu0 0.0
        %649 = vmatprep.subr.mxu0 0.0
        %650 = vmatpush1.msra.mxu0 0.0
        %651 = vmatprep.subr.mxu0 0.0
        %652 = vmatpush1.msra.mxu0 0.0
        %653 = vmatprep.subr.mxu0 0.0
        %654 = vmatpush1.msra.mxu0 0.0
        %655 = vmatprep.subr.mxu0 0.0
        %656 = vmatpush1.msra.mxu0 0.0
        %657 = vmatprep.subr.mxu0 0.0
        %658 = vmatpush1.msra.mxu0 0.0
        %659 = vmatprep.subr.mxu0 0.0
        %660 = vmatpush1.msra.mxu0 0.0
        %661 = vmatprep.subr.mxu0 0.0
        %662 = vmatpush1.msra.mxu0 0.0
        %663 = vmatprep.subr.mxu0 0.0
        %664 = vmatpush1.msra.mxu0 0.0
        %665 = vmatprep.subr.mxu0 0.0
        %666 = vmatpush1.msra.mxu0 0.0
        %667 = vmatprep.subr.mxu0 0.0
        %668 = vmatpush1.msra.mxu0 0.0
        %669 = vmatprep.subr.mxu0 0.0
        %670 = vmatpush1.msra.mxu0 0.0
        %671 = vmatprep.subr.mxu0 0.0
        %672 = vmatpush1.msra.mxu0 0.0
        %673 = vmatprep.subr.mxu0 0.0
        %674 = vmatpush1.msra.mxu0 0.0
        %675 = vmatprep.subr.mxu0 0.0
        %676 = vmatpush1.msra.mxu0 0.0
        %677 = vmatprep.subr.mxu0 0.0
        %678 = vmatpush1.msra.mxu0 0.0
        %679 = vmatprep.subr.mxu0 0.0
        %680 = vmatpush1.msra.mxu0 0.0
        %681 = vmatprep.subr.mxu0 0.0
        %682 = vmatpush1.msra.mxu0 0.0
        %683 = vmatprep.subr.mxu0 0.0
        %684 = vmatpush1.msra.mxu0 0.0
        %685 = vmatprep.subr.mxu0 0.0
        %686 = vmatpush1.msra.mxu0 0.0
        %687 = vmatprep.subr.mxu0 0.0
        %688 = vmatpush1.msra.mxu0 0.0
        %689 = vmatprep.subr.mxu0 0.0
        %690 = vmatpush1.msra.mxu0 0.0
        %691 = vmatprep.subr.mxu0 0.0
        %692 = vmatpush1.msra.mxu0 0.0
        %693 = vmatprep.mubr.f32.mxu0 0.0
        %694 = vmatmul.mubr.f32.gmra.mrb[0].mxu0 %v627
        %v695 = vpop.f32.mrb[0].mxu0
        %v696 = vadd.f32 0.0, %v695
        %v697 = vpop.f32.mrb[0].mxu0
        %698 = vdwg.mxu0
        %v699 = vld [vmem:[%s1] sm:$0x1]
        %v700 = vmul.f32 %v696, %v699
        %v701 = vld [vmem:[%s2] sm:$0x1]
        %v702 = vmul.f32 %v516, %v700
        %v703 = vsub.f32 %v701, %v702
        %v704 = vld [vmem:[%s5] sm:$0xff]
        %v705 = vld [vmem:[%s5 + $0x8] sm:$0xf]
        %v706 = vld [vmem:[%s5 + $0xc] sm:$0xff]
        %v707 = vld [vmem:[%s5 + $0x14] sm:$0xf]
        %v708 = vld [vmem:[%s5 + $0x18] sm:$0xff]
        %v709 = vld [vmem:[%s5 + $0x20] sm:$0xf]
        %v710 = vld [vmem:[%s5 + $0x24] sm:$0xff]
        %v711 = vld [vmem:[%s5 + $0x2c] sm:$0xf]
        %v712 = vld [vmem:[%s5 + $0x30] sm:$0xff]
        %v713 = vld [vmem:[%s5 + $0x38] sm:$0xf]
        %v714 = vld [vmem:[%s5 + $0x3c] sm:$0xff]
        %v715 = vld [vmem:[%s5 + $0x44] sm:$0xf]
        %v716 = vld [vmem:[%s5 + $0x48] sm:$0xff]
        %v717 = vld [vmem:[%s5 + $0x50] sm:$0xf]
        %v718 = vld [vmem:[%s5 + $0x54] sm:$0xff]
        %v719 = vld [vmem:[%s5 + $0x5c] sm:$0xf]
        %v720 = vld [vmem:[%s5 + $0x60] sm:$0xff]
        %v721 = vld [vmem:[%s5 + $0x68] sm:$0xf]
        %v722 = vld [vmem:[%s5 + $0x6c] sm:$0xff]
        %v723 = vld [vmem:[%s5 + $0x74] sm:$0xf]
        %v724 = vld [vmem:[%s5 + $0x78] sm:$0xff]
        %v725 = vld [vmem:[%s5 + $0x80] sm:$0xf]
        %v726 = vld [vmem:[%s5 + $0x84] sm:$0xff]
        %v727 = vld [vmem:[%s5 + $0x8c] sm:$0xf]
        %v728 = vld [vmem:[%s5 + $0x90] sm:$0xff]
        %v729 = vld [vmem:[%s5 + $0x98] sm:$0xf]
        %v730 = vld [vmem:[%s5 + $0x9c] sm:$0xff]
        %v731 = vld [vmem:[%s5 + $0xa4] sm:$0xf]
        %v732 = vld [vmem:[%s5 + $0xa8] sm:$0xff]
        %v733 = vld [vmem:[%s5 + $0xb0] sm:$0xf]
        %v734 = vld [vmem:[%s5 + $0xb4] sm:$0xff]
        %v735 = vld [vmem:[%s5 + $0xbc] sm:$0xf]
        %v736 = vld [vmem:[%s6] sm:$0x7]
        %v737 = vlaneseq
        %v738 = vshrl.u32 %v737, 7
        %v739 = vsub.s32 0, %v738
        %v740 = vrot.slane %v700, %v739
        %v741 = vmul.f32 %v352, %v740
        %v742 = vmul.f32 %v353, %v740
        %v743 = vmul.f32 %v354, %v740
        %v744 = vmul.f32 %v355, %v740
        %v745 = vmul.f32 %v356, %v740
        %v746 = vmul.f32 %v357, %v740
        %v747 = vmul.f32 %v358, %v740
        %v748 = vmul.f32 %v359, %v740
        %v750 = vlaneseq
        %v751 = vshrl.u32 %v750, 7
        %v752 = vsub.s32 0, %v751
        %v753 = vrot.slane %v703, %v752
        %v755 = vadd.f32 %v741, %v753
        %v756 = vadd.f32 %v742, %v753
        %v757 = vadd.f32 %v743, %v753
        %v758 = vadd.f32 %v744, %v753
        %v759 = vadd.f32 %v745, %v753
        %v760 = vadd.f32 %v746, %v753
        %v761 = vadd.f32 %v747, %v753
        %v762 = vadd.f32 %v748, %v753
        %v763 = vpack.c.bf16 %v756, %v755
        %v764 = vpack.c.bf16 %v758, %v757
        %v765 = vpack.c.bf16 %v760, %v759
        %v766 = vpack.c.bf16 %v762, %v761
        %v768 = vlaneseq
        %v769 = vshrl.u32 %v768, 7
        %v770 = vsub.s32 0, %v769
        %v771 = vrot.slane %v736, %v770
        %v772 = vlaneseq
        %v773 = vshrl.u32 %v772, 7
        %v774 = vsub.s32 1, %v773
        %v775 = vrot.slane %v736, %v774
        %v776 = vlaneseq
        %v777 = vshrl.u32 %v776, 7
        %v778 = vsub.s32 2, %v777
        %v779 = vrot.slane %v736, %v778
        %v815 = vunpack.c.l.b16 %v704
        %v816 = vunpack.c.h.b16 %v704
        %v817 = vunpack.c.l.b16 %v705
        %v818 = vunpack.c.l.b16 %v706
        %v819 = vunpack.c.h.b16 %v706
        %v820 = vunpack.c.l.b16 %v707
        %v821 = vunpack.c.l.b16 %v708
        %v822 = vunpack.c.h.b16 %v708
        %v823 = vunpack.c.l.b16 %v709
        %v824 = vunpack.c.l.b16 %v710
        %v825 = vunpack.c.h.b16 %v710
        %v826 = vunpack.c.l.b16 %v711
        %v827 = vunpack.c.l.b16 %v712
        %v828 = vunpack.c.h.b16 %v712
        %v829 = vunpack.c.l.b16 %v713
        %v830 = vunpack.c.l.b16 %v714
        %v831 = vunpack.c.h.b16 %v714
        %v832 = vunpack.c.l.b16 %v715
        %v833 = vunpack.c.l.b16 %v716
        %v834 = vunpack.c.h.b16 %v716
        %v835 = vunpack.c.l.b16 %v717
        %v836 = vunpack.c.l.b16 %v718
        %v837 = vunpack.c.h.b16 %v718
        %v838 = vunpack.c.l.b16 %v719
        %v839 = vunpack.c.l.b16 %v720
        %v840 = vunpack.c.h.b16 %v720
        %v841 = vunpack.c.l.b16 %v721
        %v842 = vunpack.c.l.b16 %v722
        %v843 = vunpack.c.h.b16 %v722
        %v844 = vunpack.c.l.b16 %v723
        %v845 = vunpack.c.l.b16 %v724
        %v846 = vunpack.c.h.b16 %v724
        %v847 = vunpack.c.l.b16 %v725
        %v848 = vunpack.c.l.b16 %v726
        %v849 = vunpack.c.h.b16 %v726
        %v850 = vunpack.c.l.b16 %v727
        %v851 = vunpack.c.l.b16 %v728
        %v852 = vunpack.c.h.b16 %v728
        %v853 = vunpack.c.l.b16 %v729
        %v854 = vunpack.c.l.b16 %v730
        %v855 = vunpack.c.h.b16 %v730
        %v856 = vunpack.c.l.b16 %v731
        %v857 = vunpack.c.l.b16 %v732
        %v858 = vunpack.c.h.b16 %v732
        %v859 = vunpack.c.l.b16 %v733
        %v860 = vunpack.c.l.b16 %v734
        %v861 = vunpack.c.h.b16 %v734
        %v862 = vunpack.c.l.b16 %v735
        %v863 = vpack.c.b16 %v818, %v815
        %v864 = vpack.c.b16 %v819, %v816
        %v865 = vpack.c.b16 %v820, %v817
        %v866 = vpack.c.b16 %v824, %v821
        %v867 = vpack.c.b16 %v825, %v822
        %v868 = vpack.c.b16 %v826, %v823
        %v869 = vpack.c.b16 %v830, %v827
        %v870 = vpack.c.b16 %v831, %v828
        %v871 = vpack.c.b16 %v832, %v829
        %v872 = vpack.c.b16 %v836, %v833
        %v873 = vpack.c.b16 %v837, %v834
        %v874 = vpack.c.b16 %v838, %v835
        %v875 = vpack.c.b16 %v842, %v839
        %v876 = vpack.c.b16 %v843, %v840
        %v877 = vpack.c.b16 %v844, %v841
        %v878 = vpack.c.b16 %v848, %v845
        %v879 = vpack.c.b16 %v849, %v846
        %v880 = vpack.c.b16 %v850, %v847
        %v881 = vpack.c.b16 %v854, %v851
        %v882 = vpack.c.b16 %v855, %v852
        %v883 = vpack.c.b16 %v856, %v853
        %v884 = vpack.c.b16 %v860, %v857
        %v885 = vpack.c.b16 %v861, %v858
        %v886 = vpack.c.b16 %v862, %v859
        %911 = vmatprep.subr.bf16.mxu0 %v864
        %912 = vmatpush1.bf16.msra.mxu0 %v863
        %913 = vmatprep.subr.bf16.mxu0 %v867
        %914 = vmatpush1.bf16.msra.mxu0 %v866
        %915 = vmatprep.subr.bf16.mxu0 %v870
        %916 = vmatpush1.bf16.msra.mxu0 %v869
        %917 = vmatprep.subr.bf16.mxu0 %v873
        %918 = vmatpush1.bf16.msra.mxu0 %v872
        %919 = vmatprep.subr.bf16.mxu0 %v876
        %920 = vmatpush1.bf16.msra.mxu0 %v875
        %921 = vmatprep.subr.bf16.mxu0 %v879
        %922 = vmatpush1.bf16.msra.mxu0 %v878
        %923 = vmatprep.subr.bf16.mxu0 %v882
        %924 = vmatpush1.bf16.msra.mxu0 %v881
        %925 = vmatprep.subr.bf16.mxu0 %v885
        %926 = vmatpush1.bf16.msra.mxu0 %v884
        %927 = vmatprep.subr.bf16.mxu0 0
        %928 = vmatpush1.bf16.msra.mxu0 0
        %929 = vmatprep.subr.bf16.mxu0 0
        %930 = vmatpush1.bf16.msra.mxu0 0
        %931 = vmatprep.subr.bf16.mxu0 0
        %932 = vmatpush1.bf16.msra.mxu0 0
        %933 = vmatprep.subr.bf16.mxu0 0
        %934 = vmatpush1.bf16.msra.mxu0 0
        %935 = vmatprep.subr.bf16.mxu0 0
        %936 = vmatpush1.bf16.msra.mxu0 0
        %937 = vmatprep.subr.bf16.mxu0 0
        %938 = vmatpush1.bf16.msra.mxu0 0
        %939 = vmatprep.subr.bf16.mxu0 0
        %940 = vmatpush1.bf16.msra.mxu0 0
        %941 = vmatprep.subr.bf16.mxu0 0
        %942 = vmatpush1.bf16.msra.mxu0 0
        %943 = vmatprep.mubr.bf16.mxu0 0
        %944 = vmatmul.mubr.bf16.gmra.mrb[0].mxu0 %v763
        %v945 = vpop.f32.mrb[0].mxu0
        %v946 = vadd.f32 %v771, %v945
        %v947 = vpop.f32.mrb[0].mxu0
        %v948 = vadd.f32 %v775, %v947
        %v949 = vpop.f32.mrb[0].mxu0
        %v950 = vadd.f32 %v771, %v949
        %v951 = vpop.f32.mrb[0].mxu0
        %v952 = vadd.f32 %v775, %v951
        %953 = vmatprep.mubr.bf16.mxu0 0
        %954 = vmatmul.mubr.bf16.gmra.mrb[0].mxu0 %v764
        %v955 = vpop.f32.mrb[0].mxu0
        %v956 = vadd.f32 %v771, %v955
        %v957 = vpop.f32.mrb[0].mxu0
        %v958 = vadd.f32 %v775, %v957
        %v959 = vpop.f32.mrb[0].mxu0
        %v960 = vadd.f32 %v771, %v959
        %v961 = vpop.f32.mrb[0].mxu0
        %v962 = vadd.f32 %v775, %v961
        %963 = vmatprep.mubr.bf16.mxu0 0
        %964 = vmatmul.mubr.bf16.gmra.mrb[0].mxu0 %v765
        %v965 = vpop.f32.mrb[0].mxu0
        %v966 = vadd.f32 %v771, %v965
        %v967 = vpop.f32.mrb[0].mxu0
        %v968 = vadd.f32 %v775, %v967
        %v969 = vpop.f32.mrb[0].mxu0
        %v970 = vadd.f32 %v771, %v969
        %v971 = vpop.f32.mrb[0].mxu0
        %v972 = vadd.f32 %v775, %v971
        %973 = vmatprep.mubr.bf16.mxu0 0
        %974 = vmatmul.mubr.bf16.gmra.mrb[0].mxu0 %v766
        %v975 = vpop.f32.mrb[0].mxu0
        %v976 = vadd.f32 %v771, %v975
        %v977 = vpop.f32.mrb[0].mxu0
        %v978 = vadd.f32 %v775, %v977
        %v979 = vpop.f32.mrb[0].mxu0
        %v980 = vadd.f32 %v771, %v979
        %v981 = vpop.f32.mrb[0].mxu0
        %v982 = vadd.f32 %v775, %v981
        %983 = vdwg.mxu0
        %984 = vmatprep.subr.bf16.mxu0 0
        %985 = vmatpush1.bf16.msra.mxu0 %v865
        %986 = vmatprep.subr.bf16.mxu0 0
        %987 = vmatpush1.bf16.msra.mxu0 %v868
        %988 = vmatprep.subr.bf16.mxu0 0
        %989 = vmatpush1.bf16.msra.mxu0 %v871
        %990 = vmatprep.subr.bf16.mxu0 0
        %991 = vmatpush1.bf16.msra.mxu0 %v874
        %992 = vmatprep.subr.bf16.mxu0 0
        %993 = vmatpush1.bf16.msra.mxu0 %v877
        %994 = vmatprep.subr.bf16.mxu0 0
        %995 = vmatpush1.bf16.msra.mxu0 %v880
        %996 = vmatprep.subr.bf16.mxu0 0
        %997 = vmatpush1.bf16.msra.mxu0 %v883
        %998 = vmatprep.subr.bf16.mxu0 0
        %999 = vmatpush1.bf16.msra.mxu0 %v886
        %1000 = vmatprep.subr.bf16.mxu0 0
        %1001 = vmatpush1.bf16.msra.mxu0 0
        %1002 = vmatprep.subr.bf16.mxu0 0
        %1003 = vmatpush1.bf16.msra.mxu0 0
        %1004 = vmatprep.subr.bf16.mxu0 0
        %1005 = vmatpush1.bf16.msra.mxu0 0
        %1006 = vmatprep.subr.bf16.mxu0 0
        %1007 = vmatpush1.bf16.msra.mxu0 0
        %1008 = vmatprep.subr.bf16.mxu0 0
        %1009 = vmatpush1.bf16.msra.mxu0 0
        %1010 = vmatprep.subr.bf16.mxu0 0
        %1011 = vmatpush1.bf16.msra.mxu0 0
        %1012 = vmatprep.subr.bf16.mxu0 0
        %1013 = vmatpush1.bf16.msra.mxu0 0
        %1014 = vmatprep.subr.bf16.mxu0 0
        %1015 = vmatpush1.bf16.msra.mxu0 0
        %1016 = vmatprep.mubr.bf16.mxu0 0
        %1017 = vmatmul.mubr.bf16.gmra.mrb[0].mxu0 %v763
        %v1018 = vpop.f32.mrb[0].mxu0
        %v1019 = vadd.f32 %v779, %v1018
        %v1020 = vpop.f32.mrb[0].mxu0
        %v1021 = vpop.f32.mrb[0].mxu0
        %v1022 = vadd.f32 %v779, %v1021
        %v1023 = vpop.f32.mrb[0].mxu0
        %1024 = vmatprep.mubr.bf16.mxu0 0
        %1025 = vmatmul.mubr.bf16.gmra.mrb[0].mxu0 %v764
        %v1026 = vpop.f32.mrb[0].mxu0
        %v1027 = vadd.f32 %v779, %v1026
        %v1028 = vpop.f32.mrb[0].mxu0
        %v1029 = vpop.f32.mrb[0].mxu0
        %v1030 = vadd.f32 %v779, %v1029
        %v1031 = vpop.f32.mrb[0].mxu0
        %1032 = vmatprep.mubr.bf16.mxu0 0
        %1033 = vmatmul.mubr.bf16.gmra.mrb[0].mxu0 %v765
        %v1034 = vpop.f32.mrb[0].mxu0
        %v1035 = vadd.f32 %v779, %v1034
        %v1036 = vpop.f32.mrb[0].mxu0
        %v1037 = vpop.f32.mrb[0].mxu0
        %v1038 = vadd.f32 %v779, %v1037
        %v1039 = vpop.f32.mrb[0].mxu0
        %1040 = vmatprep.mubr.bf16.mxu0 0
        %1041 = vmatmul.mubr.bf16.gmra.mrb[0].mxu0 %v766
        %v1042 = vpop.f32.mrb[0].mxu0
        %v1043 = vadd.f32 %v779, %v1042
        %v1044 = vpop.f32.mrb[0].mxu0
        %v1045 = vpop.f32.mrb[0].mxu0
        %v1046 = vadd.f32 %v779, %v1045
        %v1047 = vpop.f32.mrb[0].mxu0
        %1048 = vdwg.mxu0
        %v1049 = vpack.c.bf16 %v950, %v946
        %v1050 = vpack.c.bf16 %v960, %v956
        %v1051 = vpack.c.bf16 %v970, %v966
        %v1052 = vpack.c.bf16 %v980, %v976
        %1053 = vst [vmem:[#allocation2] sm:$0xff] %v1049
        %1054 = vst [vmem:[#allocation2 + $0x8] sm:$0xff] %v1050
        %1055 = vst [vmem:[#allocation2 + $0x10] sm:$0xff] %v1051
        %1056 = vst [vmem:[#allocation2 + $0x18] sm:$0xff] %v1052
        %v1057 = vpack.c.bf16 %v952, %v948
        %v1058 = vpack.c.bf16 %v962, %v958
        %v1059 = vpack.c.bf16 %v972, %v968
        %v1060 = vpack.c.bf16 %v982, %v978
        %1061 = vst [vmem:[#allocation3] sm:$0xff] %v1057
        %1062 = vst [vmem:[#allocation3 + $0x8] sm:$0xff] %v1058
        %1063 = vst [vmem:[#allocation3 + $0x10] sm:$0xff] %v1059
        %1064 = vst [vmem:[#allocation3 + $0x18] sm:$0xff] %v1060
        %v1065 = vpack.c.bf16 %v1022, %v1019
        %v1066 = vpack.c.bf16 %v1030, %v1027
        %v1067 = vpack.c.bf16 %v1038, %v1035
        %v1068 = vpack.c.bf16 %v1046, %v1043
        %1069 = vst [vmem:[#allocation5] sm:$0xff] %v1065
        %1070 = vst [vmem:[#allocation5 + $0x8] sm:$0xff] %v1066
        %1071 = vst [vmem:[#allocation5 + $0x10] sm:$0xff] %v1067
        %1072 = vst [vmem:[#allocation5 + $0x18] sm:$0xff] %v1068
        %v1073 = vld [vmem:[#allocation3] sm:$0xff]
        %v1074 = vld [vmem:[#allocation3 + $0x8] sm:$0xff]
        %v1075 = vld [vmem:[#allocation3 + $0x10] sm:$0xff]
        %v1076 = vld [vmem:[#allocation3 + $0x18] sm:$0xff]
        %1077 = vxpose.xlu0.c.b16.start [1/8] %v1073, 128
        %1078 = vxpose.xlu0.c.b16.cont [2/8] %v1074, 128
        %1079 = vxpose.xlu0.c.b16.cont [3/8] %v1075, 128
        %1080 = vxpose.xlu0.c.b16.cont [4/8] %v1076, 128
        %1081 = vxpose.xlu0.c.b16.cont [5/8] 0, 128
        %1082 = vxpose.xlu0.c.b16.cont [6/8] 0, 128
        %1083 = vxpose.xlu0.c.b16.cont [7/8] 0, 128
        %1084 = vxpose.xlu0.c.b16.end [8/8] 0, 128
        %v1085 = vpop.trf.xlu0
        %v1086 = vpop.trf.xlu0
        %v1087 = vpop.trf.xlu0
        %v1088 = vpop.trf.xlu0
        %v1089 = vpop.trf.xlu0
        %v1090 = vpop.trf.xlu0
        %v1091 = vpop.trf.xlu0
        %v1092 = vpop.trf.xlu0
        %vm1093 = vcmask 523264
        %1094 = vst.msk [vmem:[#allocation4] sm:$0xff] %vm1093, %v1085
        %1095 = vst.msk [vmem:[#allocation4 + $0x8] sm:$0xff] %vm1093, %v1086
        %1096 = vst.msk [vmem:[#allocation4 + $0x10] sm:$0xff] %vm1093, %v1087
        %1097 = vst.msk [vmem:[#allocation4 + $0x18] sm:$0xff] %vm1093, %v1088
        %1098 = vst.msk [vmem:[#allocation4 + $0x20] sm:$0xff] %vm1093, %v1089
        %1099 = vst.msk [vmem:[#allocation4 + $0x28] sm:$0xff] %vm1093, %v1090
        %1100 = vst.msk [vmem:[#allocation4 + $0x30] sm:$0xff] %vm1093, %v1091
        %1101 = vst.msk [vmem:[#allocation4 + $0x38] sm:$0xff] %vm1093, %v1092
        %v1102 = vld [vmem:[%s7] sm:$0xf]
        %v1103 = vld [vmem:[%s7 + $0x4] sm:$0xf]
        %v1104 = vld [vmem:[%s7 + $0x8] sm:$0xf]
        %v1105 = vld [vmem:[%s7 + $0xc] sm:$0xf]
        %v1106 = vld [vmem:[%s7 + $0x10] sm:$0xf]
        %v1107 = vld [vmem:[%s7 + $0x14] sm:$0xf]
        %v1108 = vld [vmem:[%s7 + $0x18] sm:$0xf]
        %v1109 = vld [vmem:[%s7 + $0x1c] sm:$0xf]
        %v1110 = vld [vmem:[%s7 + $0x20] sm:$0xf]
        %v1111 = vld [vmem:[%s7 + $0x24] sm:$0xf]
        %v1112 = vld [vmem:[%s7 + $0x28] sm:$0xf]
        %v1113 = vld [vmem:[%s7 + $0x2c] sm:$0xf]
        %v1114 = vld [vmem:[%s7 + $0x30] sm:$0xf]
        %v1115 = vld [vmem:[%s7 + $0x34] sm:$0xf]
        %v1116 = vld [vmem:[%s7 + $0x38] sm:$0xf]
        %v1117 = vld [vmem:[%s7 + $0x3c] sm:$0xf]
        %v1118 = vld [vmem:[%s8] sm:$0x1]
        %v1119 = vld [vmem:[#allocation2] sm:$0xff]
        %v1120 = vld [vmem:[#allocation2 + $0x8] sm:$0xff]
        %v1121 = vld [vmem:[#allocation2 + $0x10] sm:$0xff]
        %v1122 = vld [vmem:[#allocation2 + $0x18] sm:$0xff]
        %v1123 = vld [vmem:[#allocation4] sm:$0xff]
        %v1124 = vld [vmem:[#allocation4 + $0x8] sm:$0xff]
        %v1125 = vld [vmem:[#allocation4 + $0x10] sm:$0xff]
        %v1126 = vld [vmem:[#allocation4 + $0x18] sm:$0xff]
        %v1127 = vld [vmem:[#allocation4 + $0x20] sm:$0xff]
        %v1128 = vld [vmem:[#allocation4 + $0x28] sm:$0xff]
        %v1129 = vld [vmem:[#allocation4 + $0x30] sm:$0xff]
        %v1130 = vld [vmem:[#allocation4 + $0x38] sm:$0xff]
        %1131 = vmatprep.subr.bf16.mxu0 0
        %1132 = vmatpush1.bf16.msra.mxu0 %v1123
        %1133 = vmatprep.subr.bf16.mxu0 0
        %1134 = vmatpush1.bf16.msra.mxu0 %v1124
        %1135 = vmatprep.subr.bf16.mxu0 0
        %1136 = vmatpush1.bf16.msra.mxu0 %v1125
        %1137 = vmatprep.subr.bf16.mxu0 0
        %1138 = vmatpush1.bf16.msra.mxu0 %v1126
        %1139 = vmatprep.subr.bf16.mxu0 0
        %1140 = vmatpush1.bf16.msra.mxu0 %v1127
        %1141 = vmatprep.subr.bf16.mxu0 0
        %1142 = vmatpush1.bf16.msra.mxu0 %v1128
        %1143 = vmatprep.subr.bf16.mxu0 0
        %1144 = vmatpush1.bf16.msra.mxu0 %v1129
        %1145 = vmatprep.subr.bf16.mxu0 0
        %1146 = vmatpush1.bf16.msra.mxu0 %v1130
        %1147 = vmatprep.subr.bf16.mxu0 0
        %1148 = vmatpush1.bf16.msra.mxu0 0
        %1149 = vmatprep.subr.bf16.mxu0 0
        %1150 = vmatpush1.bf16.msra.mxu0 0
        %1151 = vmatprep.subr.bf16.mxu0 0
        %1152 = vmatpush1.bf16.msra.mxu0 0
        %1153 = vmatprep.subr.bf16.mxu0 0
        %1154 = vmatpush1.bf16.msra.mxu0 0
        %1155 = vmatprep.subr.bf16.mxu0 0
        %1156 = vmatpush1.bf16.msra.mxu0 0
        %1157 = vmatprep.subr.bf16.mxu0 0
        %1158 = vmatpush1.bf16.msra.mxu0 0
        %1159 = vmatprep.subr.bf16.mxu0 0
        %1160 = vmatpush1.bf16.msra.mxu0 0
        %1161 = vmatprep.subr.bf16.mxu0 0
        %1162 = vmatpush1.bf16.msra.mxu0 0
        %1163 = vmatprep.mubr.bf16.mxu0 0
        %1164 = vmatmul.mubr.bf16.gmra.mrb[0].mxu0 %v1119
        %v1165 = vpop.f32.mrb[0].mxu0
        %v1166 = vadd.f32 0.0, %v1165
        %v1167 = vpop.f32.mrb[0].mxu0
        %v1168 = vpop.f32.mrb[0].mxu0
        %v1169 = vadd.f32 0.0, %v1168
        %v1170 = vpop.f32.mrb[0].mxu0
        %1171 = vmatprep.mubr.bf16.mxu0 0
        %1172 = vmatmul.mubr.bf16.gmra.mrb[0].mxu0 %v1120
        %v1173 = vpop.f32.mrb[0].mxu0
        %v1174 = vadd.f32 0.0, %v1173
        %v1175 = vpop.f32.mrb[0].mxu0
        %v1176 = vpop.f32.mrb[0].mxu0
        %v1177 = vadd.f32 0.0, %v1176
        %v1178 = vpop.f32.mrb[0].mxu0
        %1179 = vmatprep.mubr.bf16.mxu0 0
        %1180 = vmatmul.mubr.bf16.gmra.mrb[0].mxu0 %v1121
        %v1181 = vpop.f32.mrb[0].mxu0
        %v1182 = vadd.f32 0.0, %v1181
        %v1183 = vpop.f32.mrb[0].mxu0
        %v1184 = vpop.f32.mrb[0].mxu0
        %v1185 = vadd.f32 0.0, %v1184
        %v1186 = vpop.f32.mrb[0].mxu0
        %1187 = vmatprep.mubr.bf16.mxu0 0
        %1188 = vmatmul.mubr.bf16.gmra.mrb[0].mxu0 %v1122
        %v1189 = vpop.f32.mrb[0].mxu0
        %v1190 = vadd.f32 0.0, %v1189
        %v1191 = vpop.f32.mrb[0].mxu0
        %v1192 = vpop.f32.mrb[0].mxu0
        %v1193 = vadd.f32 0.0, %v1192
        %v1194 = vpop.f32.mrb[0].mxu0
        %1195 = vdwg.mxu0
        %v1196 = vsel %vm1093, %v1166, -inf
        %1197 = vmax.xlane.f32.xlu0 %v1196
        %v1198 = vpop.xlane.xlu0 %1197
        %v1199 = vsel %vm1093, %v1169, -inf
        %1200 = vmax.xlane.f32.xlu0 %v1199
        %v1201 = vpop.xlane.xlu0 %1200
        %v1202 = vsel %vm1093, %v1174, -inf
        %1203 = vmax.xlane.f32.xlu0 %v1202
        %v1204 = vpop.xlane.xlu0 %1203
        %v1205 = vsel %vm1093, %v1177, -inf
        %1206 = vmax.xlane.f32.xlu0 %v1205
        %v1207 = vpop.xlane.xlu0 %1206
        %v1208 = vsel %vm1093, %v1182, -inf
        %1209 = vmax.xlane.f32.xlu0 %v1208
        %v1210 = vpop.xlane.xlu0 %1209
        %v1211 = vsel %vm1093, %v1185, -inf
        %1212 = vmax.xlane.f32.xlu0 %v1211
        %v1213 = vpop.xlane.xlu0 %1212
        %v1214 = vsel %vm1093, %v1190, -inf
        %1215 = vmax.xlane.f32.xlu0 %v1214
        %v1216 = vpop.xlane.xlu0 %1215
        %v1217 = vsel %vm1093, %v1193, -inf
        %1218 = vmax.xlane.f32.xlu0 %v1217
        %v1219 = vpop.xlane.xlu0 %1218
        %v1220 = vsub.f32 %v1166, %v1198
        %v1221 = vsub.f32 %v1169, %v1201
        %v1222 = vsub.f32 %v1174, %v1204
        %v1223 = vsub.f32 %v1177, %v1207
        %v1224 = vsub.f32 %v1182, %v1210
        %v1225 = vsub.f32 %v1185, %v1213
        %v1226 = vsub.f32 %v1190, %v1216
        %v1227 = vsub.f32 %v1193, %v1219
        %v1228 = vmul.f32 %v1220, 1.442695
        %v1229 = vpow.pop %v1228
        %v1230 = vmul.f32 %v1221, 1.442695
        %v1231 = vpow.pop %v1230
        %v1232 = vmul.f32 %v1222, 1.442695
        %v1233 = vpow.pop %v1232
        %v1234 = vmul.f32 %v1223, 1.442695
        %v1235 = vpow.pop %v1234
        %v1236 = vmul.f32 %v1224, 1.442695
        %v1237 = vpow.pop %v1236
        %v1238 = vmul.f32 %v1225, 1.442695
        %v1239 = vpow.pop %v1238
        %v1240 = vmul.f32 %v1226, 1.442695
        %v1241 = vpow.pop %v1240
        %v1242 = vmul.f32 %v1227, 1.442695
        %v1243 = vpow.pop %v1242
        %v1244 = vsel %vm1093, %v1229, 0.0
        %1245 = vadd.xlane.f32.xlu0 %v1244
        %v1246 = vpop.xlane.xlu0 %1245
        %v1247 = vsel %vm1093, %v1231, 0.0
        %1248 = vadd.xlane.f32.xlu0 %v1247
        %v1249 = vpop.xlane.xlu0 %1248
        %v1250 = vsel %vm1093, %v1233, 0.0
        %1251 = vadd.xlane.f32.xlu0 %v1250
        %v1252 = vpop.xlane.xlu0 %1251
        %v1253 = vsel %vm1093, %v1235, 0.0
        %1254 = vadd.xlane.f32.xlu0 %v1253
        %v1255 = vpop.xlane.xlu0 %1254
        %v1256 = vsel %vm1093, %v1237, 0.0
        %1257 = vadd.xlane.f32.xlu0 %v1256
        %v1258 = vpop.xlane.xlu0 %1257
        %v1259 = vsel %vm1093, %v1239, 0.0
        %1260 = vadd.xlane.f32.xlu0 %v1259
        %v1261 = vpop.xlane.xlu0 %1260
        %v1262 = vsel %vm1093, %v1241, 0.0
        %1263 = vadd.xlane.f32.xlu0 %v1262
        %v1264 = vpop.xlane.xlu0 %1263
        %v1265 = vsel %vm1093, %v1243, 0.0
        %1266 = vadd.xlane.f32.xlu0 %v1265
        %v1267 = vpop.xlane.xlu0 %1266
        %v1268 = vpack.c.bf16 %v1231, %v1229
        %v1269 = vpack.c.bf16 %v1235, %v1233
        %v1270 = vpack.c.bf16 %v1239, %v1237
        %v1271 = vpack.c.bf16 %v1243, %v1241
        %v1272 = vld [vmem:[#allocation5] sm:$0xff]
        %v1273 = vld [vmem:[#allocation5 + $0x8] sm:$0xff]
        %v1274 = vld [vmem:[#allocation5 + $0x10] sm:$0xff]
        %v1275 = vld [vmem:[#allocation5 + $0x18] sm:$0xff]
        %v1277 = vsel %vm1093, %v1268, 0
        %v1280 = vsel %vm1093, %v1269, 0
        %v1283 = vsel %vm1093, %v1270, 0
        %v1286 = vsel %vm1093, %v1271, 0
        %1288 = vmatprep.subr.bf16.mxu0 0
        %1289 = vmatpush1.bf16.msra.mxu0 %v1272
        %1290 = vmatprep.subr.bf16.mxu0 0
        %1291 = vmatpush1.bf16.msra.mxu0 %v1273
        %1292 = vmatprep.subr.bf16.mxu0 0
        %1293 = vmatpush1.bf16.msra.mxu0 %v1274
        %1294 = vmatprep.subr.bf16.mxu0 0
        %1295 = vmatpush1.bf16.msra.mxu0 %v1275
        %1296 = vmatprep.subr.bf16.mxu0 0
        %1297 = vmatpush1.bf16.msra.mxu0 0
        %1298 = vmatprep.subr.bf16.mxu0 0
        %1299 = vmatpush1.bf16.msra.mxu0 0
        %1300 = vmatprep.subr.bf16.mxu0 0
        %1301 = vmatpush1.bf16.msra.mxu0 0
        %1302 = vmatprep.subr.bf16.mxu0 0
        %1303 = vmatpush1.bf16.msra.mxu0 0
        %1304 = vmatprep.subr.bf16.mxu0 0
        %1305 = vmatpush1.bf16.msra.mxu0 0
        %1306 = vmatprep.subr.bf16.mxu0 0
        %1307 = vmatpush1.bf16.msra.mxu0 0
        %1308 = vmatprep.subr.bf16.mxu0 0
        %1309 = vmatpush1.bf16.msra.mxu0 0
        %1310 = vmatprep.subr.bf16.mxu0 0
        %1311 = vmatpush1.bf16.msra.mxu0 0
        %1312 = vmatprep.subr.bf16.mxu0 0
        %1313 = vmatpush1.bf16.msra.mxu0 0
        %1314 = vmatprep.subr.bf16.mxu0 0
        %1315 = vmatpush1.bf16.msra.mxu0 0
        %1316 = vmatprep.subr.bf16.mxu0 0
        %1317 = vmatpush1.bf16.msra.mxu0 0
        %1318 = vmatprep.subr.bf16.mxu0 0
        %1319 = vmatpush1.bf16.msra.mxu0 0
        %1320 = vmatprep.mubr.bf16.mxu0 0
        %1321 = vmatmul.mubr.bf16.gmra.mrb[0].mxu0 %v1277
        %v1322 = vpop.f32.mrb[0].mxu0
        %v1323 = vadd.f32 0.0, %v1322
        %v1324 = vpop.f32.mrb[0].mxu0
        %v1325 = vpop.f32.mrb[0].mxu0
        %v1326 = vadd.f32 0.0, %v1325
        %v1327 = vpop.f32.mrb[0].mxu0
        %1328 = vmatprep.mubr.bf16.mxu0 0
        %1329 = vmatmul.mubr.bf16.gmra.mrb[0].mxu0 %v1280
        %v1330 = vpop.f32.mrb[0].mxu0
        %v1331 = vadd.f32 0.0, %v1330
        %v1332 = vpop.f32.mrb[0].mxu0
        %v1333 = vpop.f32.mrb[0].mxu0
        %v1334 = vadd.f32 0.0, %v1333
        %v1335 = vpop.f32.mrb[0].mxu0
        %1336 = vmatprep.mubr.bf16.mxu0 0
        %1337 = vmatmul.mubr.bf16.gmra.mrb[0].mxu0 %v1283
        %v1338 = vpop.f32.mrb[0].mxu0
        %v1339 = vadd.f32 0.0, %v1338
        %v1340 = vpop.f32.mrb[0].mxu0
        %v1341 = vpop.f32.mrb[0].mxu0
        %v1342 = vadd.f32 0.0, %v1341
        %v1343 = vpop.f32.mrb[0].mxu0
        %1344 = vmatprep.mubr.bf16.mxu0 0
        %1345 = vmatmul.mubr.bf16.gmra.mrb[0].mxu0 %v1286
        %v1346 = vpop.f32.mrb[0].mxu0
        %v1347 = vadd.f32 0.0, %v1346
        %v1348 = vpop.f32.mrb[0].mxu0
        %v1349 = vpop.f32.mrb[0].mxu0
        %v1350 = vadd.f32 0.0, %v1349
        %v1351 = vpop.f32.mrb[0].mxu0
        %1352 = vdwg.mxu0
        %v1353 = vrcp.pop %v1246
        %v1354 = vrcp.pop %v1249
        %v1355 = vrcp.pop %v1252
        %v1356 = vrcp.pop %v1255
        %v1357 = vrcp.pop %v1258
        %v1358 = vrcp.pop %v1261
        %v1359 = vrcp.pop %v1264
        %v1360 = vrcp.pop %v1267
        %v1361 = vmul.f32 %v1323, %v1353
        %v1362 = vmul.f32 %v1326, %v1354
        %v1363 = vmul.f32 %v1331, %v1355
        %v1364 = vmul.f32 %v1334, %v1356
        %v1365 = vmul.f32 %v1339, %v1357
        %v1366 = vmul.f32 %v1342, %v1358
        %v1367 = vmul.f32 %v1347, %v1359
        %v1368 = vmul.f32 %v1350, %v1360
        %v1369 = vpack.c.bf16 %v1362, %v1361
        %v1370 = vpack.c.bf16 %v1364, %v1363
        %v1371 = vpack.c.bf16 %v1366, %v1365
        %v1372 = vpack.c.bf16 %v1368, %v1367
        %v1374 = vlaneseq
        %v1375 = vshrl.u32 %v1374, 7
        %v1376 = vsub.s32 0, %v1375
        %v1377 = vrot.slane %v1118, %v1376
        %v1395 = vunpack.c.l.b16 %v1102
        %v1396 = vunpack.c.l.b16 %v1103
        %v1397 = vunpack.c.l.b16 %v1104
        %v1398 = vunpack.c.l.b16 %v1105
        %v1399 = vunpack.c.l.b16 %v1106
        %v1400 = vunpack.c.l.b16 %v1107
        %v1401 = vunpack.c.l.b16 %v1108
        %v1402 = vunpack.c.l.b16 %v1109
        %v1403 = vunpack.c.l.b16 %v1110
        %v1404 = vunpack.c.l.b16 %v1111
        %v1405 = vunpack.c.l.b16 %v1112
        %v1406 = vunpack.c.l.b16 %v1113
        %v1407 = vunpack.c.l.b16 %v1114
        %v1408 = vunpack.c.l.b16 %v1115
        %v1409 = vunpack.c.l.b16 %v1116
        %v1410 = vunpack.c.l.b16 %v1117
        %v1411 = vpack.c.b16 %v1396, %v1395
        %v1412 = vpack.c.b16 %v1398, %v1397
        %v1413 = vpack.c.b16 %v1400, %v1399
        %v1414 = vpack.c.b16 %v1402, %v1401
        %v1415 = vpack.c.b16 %v1404, %v1403
        %v1416 = vpack.c.b16 %v1406, %v1405
        %v1417 = vpack.c.b16 %v1408, %v1407
        %v1418 = vpack.c.b16 %v1410, %v1409
        %1427 = vmatprep.subr.bf16.mxu0 0
        %1428 = vmatpush1.bf16.msra.mxu0 %v1411
        %1429 = vmatprep.subr.bf16.mxu0 0
        %1430 = vmatpush1.bf16.msra.mxu0 %v1412
        %1431 = vmatprep.subr.bf16.mxu0 0
        %1432 = vmatpush1.bf16.msra.mxu0 %v1413
        %1433 = vmatprep.subr.bf16.mxu0 0
        %1434 = vmatpush1.bf16.msra.mxu0 %v1414
        %1435 = vmatprep.subr.bf16.mxu0 0
        %1436 = vmatpush1.bf16.msra.mxu0 %v1415
        %1437 = vmatprep.subr.bf16.mxu0 0
        %1438 = vmatpush1.bf16.msra.mxu0 %v1416
        %1439 = vmatprep.subr.bf16.mxu0 0
        %1440 = vmatpush1.bf16.msra.mxu0 %v1417
        %1441 = vmatprep.subr.bf16.mxu0 0
        %1442 = vmatpush1.bf16.msra.mxu0 %v1418
        %1443 = vmatprep.subr.bf16.mxu0 0
        %1444 = vmatpush1.bf16.msra.mxu0 0
        %1445 = vmatprep.subr.bf16.mxu0 0
        %1446 = vmatpush1.bf16.msra.mxu0 0
        %1447 = vmatprep.subr.bf16.mxu0 0
        %1448 = vmatpush1.bf16.msra.mxu0 0
        %1449 = vmatprep.subr.bf16.mxu0 0
        %1450 = vmatpush1.bf16.msra.mxu0 0
        %1451 = vmatprep.subr.bf16.mxu0 0
        %1452 = vmatpush1.bf16.msra.mxu0 0
        %1453 = vmatprep.subr.bf16.mxu0 0
        %1454 = vmatpush1.bf16.msra.mxu0 0
        %1455 = vmatprep.subr.bf16.mxu0 0
        %1456 = vmatpush1.bf16.msra.mxu0 0
        %1457 = vmatprep.subr.bf16.mxu0 0
        %1458 = vmatpush1.bf16.msra.mxu0 0
        %1459 = vmatprep.mubr.bf16.mxu0 0
        %1460 = vmatmul.mubr.bf16.gmra.mrb[0].mxu0 %v1369
        %v1461 = vpop.f32.mrb[0].mxu0
        %v1462 = vadd.f32 %v1377, %v1461
        %v1463 = vpop.f32.mrb[0].mxu0
        %v1464 = vpop.f32.mrb[0].mxu0
        %v1465 = vadd.f32 %v1377, %v1464
        %v1466 = vpop.f32.mrb[0].mxu0
        %1467 = vmatprep.mubr.bf16.mxu0 0
        %1468 = vmatmul.mubr.bf16.gmra.mrb[0].mxu0 %v1370
        %v1469 = vpop.f32.mrb[0].mxu0
        %v1470 = vadd.f32 %v1377, %v1469
        %v1471 = vpop.f32.mrb[0].mxu0
        %v1472 = vpop.f32.mrb[0].mxu0
        %v1473 = vadd.f32 %v1377, %v1472
        %v1474 = vpop.f32.mrb[0].mxu0
        %1475 = vmatprep.mubr.bf16.mxu0 0
        %1476 = vmatmul.mubr.bf16.gmra.mrb[0].mxu0 %v1371
        %v1477 = vpop.f32.mrb[0].mxu0
        %v1478 = vadd.f32 %v1377, %v1477
        %v1479 = vpop.f32.mrb[0].mxu0
        %v1480 = vpop.f32.mrb[0].mxu0
        %v1481 = vadd.f32 %v1377, %v1480
        %v1482 = vpop.f32.mrb[0].mxu0
        %1483 = vmatprep.mubr.bf16.mxu0 0
        %1484 = vmatmul.mubr.bf16.gmra.mrb[0].mxu0 %v1372
        %v1485 = vpop.f32.mrb[0].mxu0
        %v1486 = vadd.f32 %v1377, %v1485
        %v1487 = vpop.f32.mrb[0].mxu0
        %v1488 = vpop.f32.mrb[0].mxu0
        %v1489 = vadd.f32 %v1377, %v1488
        %v1490 = vpop.f32.mrb[0].mxu0
        %1491 = vdwg.mxu0
        %v1492 = vld [vmem:[%s330] sm:$0xff]
        %v1493 = vld [vmem:[%s330 + $0x8] sm:$0xff]
        %v1494 = vld [vmem:[%s330 + $0x10] sm:$0xff]
        %v1495 = vld [vmem:[%s330 + $0x18] sm:$0xff]
        %v1496 = vld [vmem:[%s330 + $0x20] sm:$0xff]
        %v1497 = vld [vmem:[%s330 + $0x28] sm:$0xff]
        %v1498 = vld [vmem:[%s330 + $0x30] sm:$0xff]
        %v1499 = vld [vmem:[%s330 + $0x38] sm:$0xff]
        %v1500 = vadd.f32 %v1462, %v1492
        %v1501 = vadd.f32 %v1465, %v1493
        %v1502 = vadd.f32 %v1470, %v1494
        %v1503 = vadd.f32 %v1473, %v1495
        %v1504 = vadd.f32 %v1478, %v1496
        %v1505 = vadd.f32 %v1481, %v1497
        %v1506 = vadd.f32 %v1486, %v1498
        %v1507 = vadd.f32 %v1489, %v1499
        %1508 = vst [vmem:[%s325] sm:$0xff] %v1500
        %1509 = vst [vmem:[%s325 + $0x8] sm:$0xff] %v1501
        %1510 = vst [vmem:[%s325 + $0x10] sm:$0xff] %v1502
        %1511 = vst [vmem:[%s325 + $0x18] sm:$0xff] %v1503
        %1512 = vst [vmem:[%s325 + $0x20] sm:$0xff] %v1504
        %1513 = vst [vmem:[%s325 + $0x28] sm:$0xff] %v1505
        %1514 = vst [vmem:[%s325 + $0x30] sm:$0xff] %v1506
        %1515 = vst [vmem:[%s325 + $0x38] sm:$0xff] %v1507
        %s1516 = sand.u32 %s225, 1
        %s1517 = scalar_lea.sflag [#allocation7], %s1516
        %s1518 = sand.u32 %s225, 1
        %s1519 = smul.addr %s1518, 64
        %s1520 = scalar_lea.vmem [#allocation6], %s1519
        // Predicated region
        $region57: #{vae_attention_block.1} parent=55 // pred_check
          %p1521 = pneg %p235
        $region58: #{vae_attention_block.1} parent=55 // pred_check_branch
          %1523 = sbr.rel (%p1521) target = $region60
        $region59: #{vae_attention_block.1} parent=55 // pred_region
          %s1525 = ssub.s32 1024, 1024
          %1526 = vsyncadd %s1517, %s1525
          %s1527 = smul.addr %s23, 8
          %s1528 = smul.addr %s1527, 128
          %s1529 = scalar_lea.hbm %s9, %s1528
          %s1530 = sshll.u32 %s1520, 4
          %s1531 = int_to_ptr.vmem [resolvable:$true] %s1530
          %1536 = dma.vmem_to_hbm [thread:$0]  %s1531, 1024, %s1529, %s1517, 128, 128, 8
        $region60: #{vae_attention_block.1} parent=55 // pred_fallthru
          _
      $region56: #{vae_attention_block.1} parent=5 // pred_fallthru
        _
      %p1537 = scmp.le.s32.totalorder 2, %s18
      // Predicated region
      $region61: #{vae_attention_block.1} parent=5 // pred_check
        %p1538 = pneg %p1537
      $region62: #{vae_attention_block.1} parent=5 // pred_check_branch
        %1540 = sbr.rel (%p1538) target = $region64
      $region63: #{vae_attention_block.1} parent=5 // pred_region
        %s1541 = ssub.s32 %s18, 2
        // Predicated region
        $region65: #{vae_attention_block.1} parent=63 // pred_check
          %p1542 = pneg %p241
        $region66: #{vae_attention_block.1} parent=63 // pred_check_branch
          %1544 = sbr.rel (%p1542) target = $region68
        $region67: #{vae_attention_block.1} parent=63 // pred_region
          %s1545 = sand.u32 %s226, 1
          %s1546 = scalar_lea.sflag [#allocation7], %s1545
          %s1547 = sand.u32 %s226, 1
          %s1548 = smul.addr %s1547, 64
          %s1549 = scalar_lea.vmem [#allocation6], %s1548
          %1550 = dma.done %s1546, 1024
        $region68: #{vae_attention_block.1} parent=63 // pred_fallthru
          _
      $region64: #{vae_attention_block.1} parent=5 // pred_fallthru
        _
    $region6: #{vae_attention_block.1} parent=1 // loop_footer
      %s22 = sadd.s32 1, %s18
    $region7: #{vae_attention_block.1} parent=1 // loop_footer_branch
      %17 = sbr.rel target = $region3
    $region8: #{vae_attention_block.1} parent=1 // loop_exit
      _
    %1551 = vsyncpa [#allocation7], 1
    %s1552 = scalar_lea.sflag [#allocation7], 1
    %1553 = vsyncpa %s1552, 1

</llo_original>
